<compile_context>
chip_gen: v6e
topology: v6e:2x2x1
jax: 0.10.0
libtpu: 0.0.40
codegen_flags: <defaults>
</compile_context>

<pallas_src>
import math
import functools

import jax
import jax.numpy as jnp
from jax import lax
from jax.experimental import pallas as pl
from jax.experimental.pallas import tpu as pltpu


# ----------------------------------------------------------------------------
# Fused kernel: one (batch, query-tile) pair per grid step.
#   x_ref     : (1, T, C)   full-sequence input rows for batch b (K/V rows;
#                           the query rows are a (TQ, C) slice of it)
#   wq_ref    : (C, C)      packed Q projection, head-major columns,
#                           1/sqrt(n_emb) attention scale pre-folded in
#   wkv_ref   : (C, 2C)     packed K|V projections, head-major within each half
#   wproj_ref : (C, C)      output projection (pre-transposed: y = x @ Wproj)
#   o_ref     : (1, TQ, C)  output rows for this query tile (final layout)
# ----------------------------------------------------------------------------
def _mha_fused_kernel(x_ref, wq_ref, wkv_ref, wproj_ref, o_ref, *,
                      num_heads, head_size, n_emb, q_tile):
    H, HS, C, TQ = num_heads, head_size, n_emb, q_tile
    cdt = wq_ref.dtype                                   # MXU compute dtype

    T = x_ref.shape[1]
    q_start = pl.multiple_of(pl.program_id(1) * TQ, TQ)

    x_full = x_ref[0]                                    # (T, C)   K/V rows
    x_q = x_ref[0, pl.ds(q_start, TQ), :]                # (TQ, C)  query rows

    # Projections with f32 accumulation.  The 1/sqrt(C) scale is already
    # folded into wq_ref, so no in-kernel score scaling is needed.
    q2 = jnp.dot(x_q, wq_ref[...],
                 preferred_element_type=jnp.float32)     # (TQ, C)  f32
    kv = jnp.dot(x_full, wkv_ref[...],
                 preferred_element_type=jnp.float32)     # (T, 2C)  f32

    # Cast to the compute dtype ONCE and move to head-leading layout.
    q = jnp.transpose(q2.astype(cdt).reshape(TQ, H, HS), (1, 0, 2))        # (H,TQ,HS)
    k = jnp.transpose(kv[:, :C].astype(cdt).reshape(T, H, HS), (1, 0, 2))  # (H,T ,HS)
    v = jnp.transpose(kv[:, C:].astype(cdt).reshape(T, H, HS), (1, 0, 2))  # (H,T ,HS)

    # Batched attention scores for all heads at once (contract over HS).
    s = jnp.einsum('hqd,hkd->hqk', q, k,
                   preferred_element_type=jnp.float32)   # (H, TQ, T) f32

    # Causal mask (global query row = q_start + local row); large finite
    # negative keeps it NaN-safe.
    row = q_start + lax.broadcasted_iota(jnp.int32, (TQ, T), 0)
    col = lax.broadcasted_iota(jnp.int32, (TQ, T), 1)
    s = jnp.where((row >= col)[None, :, :], s, jnp.float32(-1e30))

    # Row-wise softmax in f32; normalisation deferred until after PV matmul.
    m = jnp.max(s, axis=-1, keepdims=True)               # (H, TQ, 1)
    p = jnp.exp(s - m)                                   # (H, TQ, T)
    l = jnp.sum(p, axis=-1, keepdims=True)               # (H, TQ, 1)

    o = jnp.einsum('hqk,hkd->hqd', p.astype(cdt), v,
                   preferred_element_type=jnp.float32)   # (H, TQ, HS) f32
    o = o * pl.reciprocal(l)                             # exact; post-PV norm

    # Head concat = transpose + reshape, never leaves VMEM.
    heads = jnp.transpose(o.astype(cdt), (1, 0, 2)).reshape(TQ, C)  # (TQ, C)

    # Fused output projection; dropout is identity in eval mode.
    y = jnp.dot(heads, wproj_ref[...],
                preferred_element_type=jnp.float32)      # (TQ, C) f32
    o_ref[0] = y.astype(o_ref.dtype)


# ----------------------------------------------------------------------------
# One-time weight preparation (call at parameter-init time, NOT per forward).
# ----------------------------------------------------------------------------
def pack_mha_weights(wq, wk, wv, wproj, *, compute_dtype=jnp.bfloat16):
    """
    wq/wk/wv : (H, C, HS) per-head weights, pre-transposed so y = x @ W
               (PyTorch nn.Linear stores (out, in) and does x @ W^T).
    wproj    : (C, C)     pre-transposed so y = x @ Wproj.
    Returns (wq_packed (C,C) with 1/sqrt(C) folded in, wkv_packed (C,2C),
             wproj) all in compute_dtype.
    """
    H, C, HS = wq.shape

    def pack(w):                                         # (H,C,HS) -> (C,H*HS)
        return jnp.transpose(w, (1, 0, 2)).reshape(C, H * HS)

    wq_p = pack(wq) * jnp.float32(1.0 / math.sqrt(C))    # fold attention scale
    wkv_p = jnp.concatenate([pack(wk), pack(wv)], axis=-1)
    return (wq_p.astype(compute_dtype),
            wkv_p.astype(compute_dtype),
            jnp.asarray(wproj).astype(compute_dtype))


def multi_head_attention(x, wq_packed, wkv_packed, wproj_packed, *,
                         num_heads, head_size, q_tile=256):
    """
    x            : (B, T, C) float32
    wq_packed    : (C, C)    from pack_mha_weights (scale folded in)
    wkv_packed   : (C, 2C)   from pack_mha_weights
    wproj_packed : (C, C)    from pack_mha_weights
    returns (B, T, C) in x.dtype
    """
    B, T, C = x.shape
    assert num_heads * head_size == C
    assert wq_packed.shape == (C, C) and wkv_packed.shape == (C, 2 * C)

    TQ = min(q_tile, T)
    assert T % TQ == 0, "sequence length must be divisible by the query tile"
    nq = T // TQ

    cdt = wq_packed.dtype
    x_c = x.astype(cdt)                                  # halves activation DMA

    kernel = functools.partial(_mha_fused_kernel, num_heads=num_heads,
                               head_size=head_size, n_emb=C, q_tile=TQ)

    return pl.pallas_call(
        kernel,
        out_shape=jax.ShapeDtypeStruct((B, T, C), x.dtype),
        grid_spec=pltpu.PrefetchScalarGridSpec(
            num_scalar_prefetch=0,
            grid=(B, nq),
            in_specs=[
                pl.BlockSpec((1, T, C), lambda b, qi: (b, 0, 0)),     # x rows
                pl.BlockSpec((C, C), lambda b, qi: (0, 0)),           # Wq
                pl.BlockSpec((C, 2 * C), lambda b, qi: (0, 0)),       # Wk|Wv
                pl.BlockSpec((C, C), lambda b, qi: (0, 0)),           # Wproj
            ],
            out_specs=pl.BlockSpec((1, TQ, C), lambda b, qi: (b, qi, 0)),
        ),
        compiler_params=pltpu.CompilerParams(
            dimension_semantics=("parallel", "parallel"),
            vmem_limit_bytes=64 * 1024 * 1024),
    )(x_c, wq_packed, wkv_packed, wproj_packed)


# ----------------------------------------------------------------------------
# Pure-JAX reference (same math as the PyTorch module) for a sanity check.
# ----------------------------------------------------------------------------
def _reference(x, wq, wk, wv, wproj):
    B, T, C = x.shape
    H, _, HS = wq.shape
    outs = []
    for h in range(H):
        q = x @ wq[h]
        k = x @ wk[h]
        v = x @ wv[h]
        s = (q @ jnp.swapaxes(k, -1, -2)) / math.sqrt(C)   # scale = 1/sqrt(n_emb)
        mask = jnp.tril(jnp.ones((T, T), dtype=bool))
        s = jnp.where(mask, s, -jnp.inf)
        p = jax.nn.softmax(s, axis=-1)
        outs.append(p @ v)
    cat = jnp.concatenate(outs, axis=-1)
    return cat @ wproj


if __name__ == "__main__":
    # Small config consistent with the module: BLOCK_SIZE == T.
    B, T = 2, 8
    num_heads, head_size = 4, 8
    n_emb = num_heads * head_size          # 32

    key = jax.random.PRNGKey(0)
    kx, kq, kk, kv, kp = jax.random.split(key, 5)

    x = jax.random.normal(kx, (B, T, n_emb), dtype=jnp.float32)

    # Deterministic "Linear(bias=False)"-style weights, pre-transposed so the
    # kernel does y = x @ W.
    scale = 1.0 / math.sqrt(n_emb)
    wq = jax.random.uniform(kq, (num_heads, n_emb, head_size),
                            minval=-scale, maxval=scale, dtype=jnp.float32)
    wk = jax.random.uniform(kk, (num_heads, n_emb, head_size),
                            minval=-scale, maxval=scale, dtype=jnp.float32)
    wv = jax.random.uniform(kv, (num_heads, n_emb, head_size),
                            minval=-scale, maxval=scale, dtype=jnp.float32)
    wproj = jax.random.uniform(kp, (n_emb, n_emb),
                               minval=-scale, maxval=scale, dtype=jnp.float32)

    # One-time weight packing (init-time cost, amortized across all calls).
    wq_p, wkv_p, wproj_p = pack_mha_weights(wq, wk, wv, wproj,
                                            compute_dtype=jnp.bfloat16)

    out = multi_head_attention(x, wq_p, wkv_p, wproj_p,
                               num_heads=num_heads, head_size=head_size)
    out = jax.block_until_ready(out)

    ref = _reference(x, wq, wk, wv, wproj)
    assert out.shape == (B, T, n_emb)
    # Tolerance reflects bf16 MXU operands (f32 accumulation); softmax and the
    # final normalisation use exact f32 math.
    assert jnp.allclose(out, ref, atol=3e-2, rtol=3e-2), "mismatch vs reference"

    print("KERNEL_OK")
</pallas_src>

<mosaic_0001>
module attributes {stable_mosaic.version = 11 : i64} {
  func.func @_mha_fused_kernel(%arg0: i32, %arg1: i32, %arg2: memref<1x8x32xbf16, #tpu.memory_space<vmem>>, %arg3: memref<32x32xbf16, #tpu.memory_space<vmem>>, %arg4: memref<32x64xbf16, #tpu.memory_space<vmem>>, %arg5: memref<32x32xbf16, #tpu.memory_space<vmem>>, %arg6: memref<1x8x32xf32, #tpu.memory_space<vmem>>) attributes {dimension_semantics = [#tpu.dimension_semantics<parallel>, #tpu.dimension_semantics<parallel>], iteration_bounds = array<i64: 2, 1>, scalar_prefetch = 0 : i64, scratch_operands = 0 : i64, tpu.core_type = #tpu.core_type<tc>, window_params = [{transform_indices = @transform_0, window_bounds = array<i64: 1, 8, 32>}, {pipeline_mode = #tpu.pipeline_mode<synchronous>, transform_indices = @transform_1, window_bounds = array<i64: 32, 32>}, {pipeline_mode = #tpu.pipeline_mode<synchronous>, transform_indices = @transform_2, window_bounds = array<i64: 32, 64>}, {pipeline_mode = #tpu.pipeline_mode<synchronous>, transform_indices = @transform_3, window_bounds = array<i64: 32, 32>}, {transform_indices = @transform_4, window_bounds = array<i64: 1, 8, 32>}]} {
    %c8_i32 = arith.constant 8 : i32
    %0 = arith.muli %arg1, %c8_i32 : i32
    %1 = tpu.assume_multiple %0, 8 : i32
    %c0 = arith.constant 0 : index
    %c0_0 = arith.constant 0 : index
    %c0_1 = arith.constant 0 : index
    %2 = vector.load %arg2[%c0, %c0_0, %c0_1] : memref<1x8x32xbf16, #tpu.memory_space<vmem>>, vector<1x8x32xbf16>
    %3 = vector.shape_cast %2 : vector<1x8x32xbf16> to vector<8x32xbf16>
    %c0_2 = arith.constant 0 : index
    %4 = arith.index_cast %1 : i32 to index
    %c0_3 = arith.constant 0 : index
    %5 = vector.load %arg2[%c0_2, %4, %c0_3] : memref<1x8x32xbf16, #tpu.memory_space<vmem>>, vector<1x8x32xbf16>
    %6 = vector.shape_cast %5 : vector<1x8x32xbf16> to vector<8x32xbf16>
    %c0_4 = arith.constant 0 : index
    %c0_5 = arith.constant 0 : index
    %7 = vector.load %arg3[%c0_4, %c0_5] : memref<32x32xbf16, #tpu.memory_space<vmem>>, vector<32x32xbf16>
    %cst = arith.constant dense<0.000000e+00> : vector<8x32xf32>
    %8 = tpu.matmul %6, %7, %cst {dimension_numbers = #tpu.dot_dimension_numbers<[1], [0], [0], [1], [0, 0, 1, 1], [], []>} : vector<8x32xbf16>, vector<32x32xbf16>, vector<8x32xf32> -> vector<8x32xf32>
    %c0_6 = arith.constant 0 : index
    %c0_7 = arith.constant 0 : index
    %9 = vector.load %arg4[%c0_6, %c0_7] : memref<32x64xbf16, #tpu.memory_space<vmem>>, vector<32x64xbf16>
    %cst_8 = arith.constant dense<0.000000e+00> : vector<8x64xf32>
    %10 = tpu.matmul %3, %9, %cst_8 {dimension_numbers = #tpu.dot_dimension_numbers<[1], [0], [0], [1], [0, 0, 1, 1], [], []>} : vector<8x32xbf16>, vector<32x64xbf16>, vector<8x64xf32> -> vector<8x64xf32>
    %11 = arith.truncf %8 : vector<8x32xf32> to vector<8x32xbf16>
    %12 = vector.shape_cast %11 : vector<8x32xbf16> to vector<8x4x8xbf16>
    %13 = tpu.transpose %12, [1, 0, 2] : vector<8x4x8xbf16> -> vector<4x8x8xbf16>
    %14 = vector.extract_strided_slice %10 {offsets = [0, 0], sizes = [8, 32], strides = [1, 1]} : vector<8x64xf32> to vector<8x32xf32>
    %15 = arith.truncf %14 : vector<8x32xf32> to vector<8x32xbf16>
    %16 = vector.shape_cast %15 : vector<8x32xbf16> to vector<8x4x8xbf16>
    %17 = tpu.transpose %16, [1, 0, 2] : vector<8x4x8xbf16> -> vector<4x8x8xbf16>
    %18 = vector.extract_strided_slice %10 {offsets = [0, 32], sizes = [8, 32], strides = [1, 1]} : vector<8x64xf32> to vector<8x32xf32>
    %19 = arith.truncf %18 : vector<8x32xf32> to vector<8x32xbf16>
    %20 = vector.shape_cast %19 : vector<8x32xbf16> to vector<8x4x8xbf16>
    %21 = tpu.transpose %20, [1, 0, 2] : vector<8x4x8xbf16> -> vector<4x8x8xbf16>
    "tpu.trace_start"() <{level = 10 : i32, message = "hqd,hkd->hqk"}> : () -> ()
    %cst_9 = arith.constant dense<0.000000e+00> : vector<4x8x8xf32>
    %22 = tpu.matmul %13, %17, %cst_9 {dimension_numbers = #tpu.dot_dimension_numbers<[2], [2], [1], [1], [0, 0, 0, 1, 1, 1], [0], [0]>} : vector<4x8x8xbf16>, vector<4x8x8xbf16>, vector<4x8x8xf32> -> vector<4x8x8xf32>
    "tpu.trace_stop"() : () -> ()
    %23 = tpu.iota {dimensions = array<i32: 0>} : vector<8x8xi32>
    %24 = vector.broadcast %1 : i32 to vector<8x8xi32>
    %25 = arith.addi %24, %23 : vector<8x8xi32>
    %26 = tpu.iota {dimensions = array<i32: 1>} : vector<8x8xi32>
    %27 = arith.cmpi sge, %25, %26 : vector<8x8xi32>
    %28 = vector.shape_cast %27 : vector<8x8xi1> to vector<1x8x8xi1>
    %cst_10 = arith.constant -1.000000e+30 : f32
    %29 = vector.shape_cast %28 : vector<1x8x8xi1> to vector<1x8x8xi1>
    %30 = vector.broadcast %29 : vector<1x8x8xi1> to vector<4x8x8xi1>
    %31 = vector.broadcast %cst_10 : f32 to vector<4x8x8xf32>
    %32 = arith.select %30, %22, %31 : vector<4x8x8xi1>, vector<4x8x8xf32>
    %cst_11 = arith.constant dense<0xFF800000> : vector<4x8xf32>
    %33 = vector.multi_reduction <maximumf>, %32, %cst_11 [2] : vector<4x8x8xf32> to vector<4x8xf32>
    %34 = vector.shape_cast %33 : vector<4x8xf32> to vector<4x8x1xf32>
    %35 = vector.broadcast %34 : vector<4x8x1xf32> to vector<4x8x8xf32>
    %36 = arith.subf %32, %35 : vector<4x8x8xf32>
    %37 = math.exp %36 : vector<4x8x8xf32>
    %cst_12 = arith.constant dense<0.000000e+00> : vector<4x8xf32>
    %38 = vector.multi_reduction <add>, %37, %cst_12 [2] : vector<4x8x8xf32> to vector<4x8xf32>
    %39 = vector.shape_cast %38 : vector<4x8xf32> to vector<4x8x1xf32>
    %40 = arith.truncf %37 : vector<4x8x8xf32> to vector<4x8x8xbf16>
    "tpu.trace_start"() <{level = 10 : i32, message = "hqk,hkd->hqd"}> : () -> ()
    %cst_13 = arith.constant dense<0.000000e+00> : vector<4x8x8xf32>
    %41 = tpu.matmul %40, %21, %cst_13 {dimension_numbers = #tpu.dot_dimension_numbers<[2], [1], [1], [2], [0, 0, 0, 1, 1, 2], [0], [0]>} : vector<4x8x8xbf16>, vector<4x8x8xbf16>, vector<4x8x8xf32> -> vector<4x8x8xf32>
    "tpu.trace_stop"() : () -> ()
    %42 = tpu.reciprocal %39 : vector<4x8x1xf32> -> vector<4x8x1xf32>
    %43 = vector.broadcast %42 : vector<4x8x1xf32> to vector<4x8x8xf32>
    %44 = arith.mulf %41, %43 : vector<4x8x8xf32>
    %45 = arith.truncf %44 : vector<4x8x8xf32> to vector<4x8x8xbf16>
    %46 = tpu.transpose %45, [1, 0, 2] : vector<4x8x8xbf16> -> vector<8x4x8xbf16>
    %47 = vector.shape_cast %46 : vector<8x4x8xbf16> to vector<8x32xbf16>
    %c0_14 = arith.constant 0 : index
    %c0_15 = arith.constant 0 : index
    %48 = vector.load %arg5[%c0_14, %c0_15] : memref<32x32xbf16, #tpu.memory_space<vmem>>, vector<32x32xbf16>
    %cst_16 = arith.constant dense<0.000000e+00> : vector<8x32xf32>
    %49 = tpu.matmul %47, %48, %cst_16 {dimension_numbers = #tpu.dot_dimension_numbers<[1], [0], [0], [1], [0, 0, 1, 1], [], []>} : vector<8x32xbf16>, vector<32x32xbf16>, vector<8x32xf32> -> vector<8x32xf32>
    %c0_17 = arith.constant 0 : index
    %c0_18 = arith.constant 0 : index
    %c0_19 = arith.constant 0 : index
    %50 = vector.load %arg6[%c0_17, %c0_18, %c0_19] : memref<1x8x32xf32, #tpu.memory_space<vmem>>, vector<1x8x32xf32>
    %51 = vector.shape_cast %50 : vector<1x8x32xf32> to vector<8x32xf32>
    %52 = vector.shape_cast %49 : vector<8x32xf32> to vector<1x8x32xf32>
    tpu.vector_store %arg6[%c0_17, %c0_18, %c0_19], %52 {strides = array<i32>} : memref<1x8x32xf32, #tpu.memory_space<vmem>>, vector<1x8x32xf32>,
    return
  }
  func.func @transform_0(%arg0: i32, %arg1: i32) -> (i32, i32, i32) {
    %c0_i32 = arith.constant 0 : i32
    %c0_i32_0 = arith.constant 0 : i32
    %c0_i32_1 = arith.constant 0 : i32
    return %arg0, %c0_i32, %c0_i32_0 : i32, i32, i32
  }
  func.func @transform_1(%arg0: i32, %arg1: i32) -> (i32, i32) {
    %c0_i32 = arith.constant 0 : i32
    %c0_i32_0 = arith.constant 0 : i32
    %c0_i32_1 = arith.constant 0 : i32
    return %c0_i32, %c0_i32_0 : i32, i32
  }
  func.func @transform_2(%arg0: i32, %arg1: i32) -> (i32, i32) {
    %c0_i32 = arith.constant 0 : i32
    %c0_i32_0 = arith.constant 0 : i32
    %c0_i32_1 = arith.constant 0 : i32
    return %c0_i32, %c0_i32_0 : i32, i32
  }
  func.func @transform_3(%arg0: i32, %arg1: i32) -> (i32, i32) {
    %c0_i32 = arith.constant 0 : i32
    %c0_i32_0 = arith.constant 0 : i32
    %c0_i32_1 = arith.constant 0 : i32
    return %c0_i32, %c0_i32_0 : i32, i32
  }
  func.func @transform_4(%arg0: i32, %arg1: i32) -> (i32, i32, i32) {
    %c0_i32 = arith.constant 0 : i32
    %c0_i32_0 = arith.constant 0 : i32
    return %arg0, %arg1, %c0_i32 : i32, i32, i32
  }
}

</mosaic_0001>

<llo_original>
// kernel: tpu_custom_call.1
$region0: #{tpu_custom_call.1}
  #allocation0 [shape = 'u32[]', space=smem, size = 0x4, offset = 0x4, fixed_abs, tag = 'smem constant byte address 0x4 - core index']
  #allocation1 [shape = 'u32[144,128]{1,0:T(1,128)}', space=vmem, size = 0x12000, scoped, tag = 'internal scratch']
  %s0 = inlined_call_operand.hbm [shape: bf16[2,8,32], index: 0, kind: input, shape index: {}]
  %s1 = inlined_call_operand.hbm [shape: bf16[32,32], index: 1, kind: input, shape index: {}]
  %s2 = inlined_call_operand.hbm [shape: bf16[32,64], index: 2, kind: input, shape index: {}]
  %s3 = inlined_call_operand.hbm [shape: bf16[32,32], index: 3, kind: input, shape index: {}]
  %s4 = inlined_call_operand.hbm [shape: f32[2,8,32], index: 4, kind: output, shape index: {}]
  %s5 = sld [smem:[#allocation0]]
  $region65: #{tpu_custom_call.1} parent=0
    _
  %s7 = ssub.s32 1, %s5
  %s8 = scalar_select 0, %s7, %s5
  $region1: #{tpu_custom_call.1} parent=0
    #allocation2 [shape = 'u8[4096]{0}', space=vmem, size = 0x1000, scoped, tag = 'input window, operand 0']
    #allocation3 [shape = 's32[2]{0}', space=sflag, size = 0x8, scoped, tag = 'scoped memory for tpu_custom_call.1']
    #allocation4 [shape = 's32[2]{0}', space=sflag, size = 0x8, scoped, tag = 'scoped memory for tpu_custom_call.1']
    #allocation5 [shape = 'u8[8192]{0}', space=vmem, size = 0x2000, scoped, tag = 'input window, operand 1, single buffered']
    #allocation6 [shape = 's32[1]{0}', space=sflag, size = 0x4, scoped, tag = 'scoped memory for tpu_custom_call.1']
    #allocation7 [shape = 'u8[8192]{0}', space=vmem, size = 0x2000, scoped, tag = 'input window, operand 2, single buffered']
    #allocation8 [shape = 'u8[8192]{0}', space=vmem, size = 0x2000, scoped, tag = 'input window, operand 3, single buffered']
    #allocation9 [shape = 's32[1]{0}', space=sflag, size = 0x4, scoped, tag = 'scoped memory for tpu_custom_call.1']
    #allocation10 [shape = 'u8[8192]{0}', space=vmem, size = 0x2000, scoped, tag = 'output window, operand 0']
    %9 = vsyncpa [#allocation3], 0
    %s10 = scalar_lea.sflag [#allocation3], 1
    %11 = vsyncpa %s10, 0
    %12 = vsyncpa [#allocation6], 0
    %13 = vsyncpa [#allocation9], 0
    %14 = vsyncpa [#allocation4], 0
    %s15 = scalar_lea.sflag [#allocation4], 1
    %16 = vsyncpa %s15, 0
    loop: start=0, step=1, limit=4
    $region2: #{tpu_custom_call.1} parent=1 // loop_pre_header
      _
    $region3: #{tpu_custom_call.1} parent=1 // loop_header
      %s18 = sphi 0, %s22
      %p19 = scmp.ge.s32.totalorder %s18, 4
      %s25 = sphi 0, %s37
      %s26 = sphi 0, %s33
      %s27 = sphi 0, %s25
      %s28 = sphi 0, %s26
      %s29 = sphi 0, %s27
      %s30 = sphi 0, %s28
      %s40 = sphi 0, %s42
      %s43 = sphi 0, %s40
      %s44 = sphi 0, %s43
      %s60 = sphi 0, %s44
      %s64 = sphi 0, %s64
      %s66 = sphi 0, %s64
      %s67 = sphi 0, %s66
      %s81 = sphi 0, %s67
      %s85 = sphi 0, %s85
      %s87 = sphi 0, %s85
      %s88 = sphi 0, %s87
      %s102 = sphi 0, %s88
      %s106 = sphi 0, %s106
      %s108 = sphi 0, %s106
      %s109 = sphi 0, %s108
      %s123 = sphi 0, %s109
      %s131 = sphi 0, %s133
      %s134 = sphi 0, %s131
      %s135 = sphi 0, %s134
      %s151 = sphi 0, %s135
    $region4: #{tpu_custom_call.1} parent=1 // loop_header_branch
      %21 = sbr.rel (%p19) target = $region8
    $region5: #{tpu_custom_call.1} parent=1 // loop_body
      %s23 = ssub.s32 %s18, 1
      %s24 = ssub.s32 %s18, 2
      %s31 = sadd.s32 1, %s26
      %p32 = scmp.ge.s32.totalorder %s31, 1
      %s33 = scalar_select %p32, 0, %s31
      %s34 = sadd.s32 1, %s25
      %s35 = scalar_select %p32, %s34, %s25
      %p36 = scmp.ge.s32.totalorder %s35, 2
      %s37 = scalar_select %p36, 0, %s35
      %s38 = ssub.s32 %s25, %s37
      %p39 = scmp.eq.s32.totalorder %s38, 0
      %s41 = sadd.s32 %s40, 1
      %s42 = scalar_select %p39, %s40, %s41
      %p45 = pneg %p39
      %p46 = scmp.eq.s32.totalorder %s18, 1
      %p47 = por %p45, %p46
      %p48 = scmp.ne.s32.totalorder %s40, %s43
      %p49 = scmp.eq.s32.totalorder %s18, 0
      %p50 = por %p48, %p49
      %p51 = scmp.ne.s32.totalorder %s40, %s43
      %p52 = scmp.eq.s32.totalorder %s23, 1
      %p53 = por %p51, %p52
      %p54 = scmp.ne.s32.totalorder %s43, %s44
      %p55 = scmp.eq.s32.totalorder %s23, 0
      %p56 = por %p54, %p55
      %p57 = scmp.ne.s32.totalorder %s43, %s44
      %p58 = scmp.eq.s32.totalorder %s24, 1
      %p59 = por %p57, %p58
      %p61 = scmp.ne.s32.totalorder %s44, %s60
      %p62 = scmp.eq.s32.totalorder %s24, 0
      %p63 = por %p61, %p62
      %s65 = sadd.s32 %s64, 1
      %p68 = scmp.eq.s32.totalorder %s18, 1
      %p69 = scmp.ne.s32.totalorder %s64, %s66
      %p70 = scmp.eq.s32.totalorder %s18, 0
      %p71 = por %p69, %p70
      %p72 = scmp.ne.s32.totalorder %s64, %s66
      %p73 = scmp.eq.s32.totalorder %s23, 1
      %p74 = por %p72, %p73
      %p75 = scmp.ne.s32.totalorder %s66, %s67
      %p76 = scmp.eq.s32.totalorder %s23, 0
      %p77 = por %p75, %p76
      %p78 = scmp.ne.s32.totalorder %s66, %s67
      %p79 = scmp.eq.s32.totalorder %s24, 1
      %p80 = por %p78, %p79
      %p82 = scmp.ne.s32.totalorder %s67, %s81
      %p83 = scmp.eq.s32.totalorder %s24, 0
      %p84 = por %p82, %p83
      %s86 = sadd.s32 %s85, 1
      %p89 = scmp.eq.s32.totalorder %s18, 1
      %p90 = scmp.ne.s32.totalorder %s85, %s87
      %p91 = scmp.eq.s32.totalorder %s18, 0
      %p92 = por %p90, %p91
      %p93 = scmp.ne.s32.totalorder %s85, %s87
      %p94 = scmp.eq.s32.totalorder %s23, 1
      %p95 = por %p93, %p94
      %p96 = scmp.ne.s32.totalorder %s87, %s88
      %p97 = scmp.eq.s32.totalorder %s23, 0
      %p98 = por %p96, %p97
      %p99 = scmp.ne.s32.totalorder %s87, %s88
      %p100 = scmp.eq.s32.totalorder %s24, 1
      %p101 = por %p99, %p100
      %p103 = scmp.ne.s32.totalorder %s88, %s102
      %p104 = scmp.eq.s32.totalorder %s24, 0
      %p105 = por %p103, %p104
      %s107 = sadd.s32 %s106, 1
      %p110 = scmp.eq.s32.totalorder %s18, 1
      %p111 = scmp.ne.s32.totalorder %s106, %s108
      %p112 = scmp.eq.s32.totalorder %s18, 0
      %p113 = por %p111, %p112
      %p114 = scmp.ne.s32.totalorder %s106, %s108
      %p115 = scmp.eq.s32.totalorder %s23, 1
      %p116 = por %p114, %p115
      %p117 = scmp.ne.s32.totalorder %s108, %s109
      %p118 = scmp.eq.s32.totalorder %s23, 0
      %p119 = por %p117, %p118
      %p120 = scmp.ne.s32.totalorder %s108, %s109
      %p121 = scmp.eq.s32.totalorder %s24, 1
      %p122 = por %p120, %p121
      %p124 = scmp.ne.s32.totalorder %s109, %s123
      %p125 = scmp.eq.s32.totalorder %s24, 0
      %p126 = por %p124, %p125
      %s127 = ssub.s32 %s25, %s37
      %s128 = ssub.s32 %s26, %s33
      %s129 = sor.u32 %s127, %s128
      %p130 = scmp.eq.s32.totalorder %s129, 0
      %s132 = sadd.s32 %s131, 1
      %s133 = scalar_select %p130, %s131, %s132
      %p136 = pneg %p130
      %p137 = scmp.eq.s32.totalorder %s18, 1
      %p138 = por %p136, %p137
      %p139 = scmp.ne.s32.totalorder %s131, %s134
      %p140 = scmp.eq.s32.totalorder %s18, 0
      %p141 = por %p139, %p140
      %p142 = scmp.ne.s32.totalorder %s131, %s134
      %p143 = scmp.eq.s32.totalorder %s23, 1
      %p144 = por %p142, %p143
      %p145 = scmp.ne.s32.totalorder %s134, %s135
      %p146 = scmp.eq.s32.totalorder %s23, 0
      %p147 = por %p145, %p146
      %p148 = scmp.ne.s32.totalorder %s134, %s135
      %p149 = scmp.eq.s32.totalorder %s24, 1
      %p150 = por %p148, %p149
      %p152 = scmp.ne.s32.totalorder %s135, %s151
      %p153 = scmp.eq.s32.totalorder %s24, 0
      %p154 = por %p152, %p153
      %p155 = scmp.le.s32.totalorder 1, %s18
      %p156 = scmp.lt.s32.totalorder %s18, 3
      %p157 = pnand %p155, %p156
      %p158 = pneg %p157
      // Predicated region
      $region9: #{tpu_custom_call.1} parent=5 // pred_check
        _
      $region10: #{tpu_custom_call.1} parent=5 // pred_check_branch
        %160 = sbr.rel (%p157) target = $region12
      $region11: #{tpu_custom_call.1} parent=5 // pred_region
        %s161 = ssub.s32 %s18, 1
        // Predicated region
        $region13: #{tpu_custom_call.1} parent=11 // pred_check
          %p162 = pneg %p77
        $region14: #{tpu_custom_call.1} parent=11 // pred_check_branch
          %164 = sbr.rel (%p162) target = $region16
        $region15: #{tpu_custom_call.1} parent=11 // pred_region
          %s166 = ssub.s32 256, 256
          %167 = vsyncadd [#allocation6], %s166
          %s168 = sshll.u32 [#allocation5], 4
          %s169 = int_to_ptr.vmem [resolvable:$true] %s168
          %174 = dma.hbm_to_vmem [thread:$0]  %s1, 256, %s169, [#allocation6], 64, 64, 4
        $region16: #{tpu_custom_call.1} parent=11 // pred_fallthru
          _
        // Predicated region
        $region17: #{tpu_custom_call.1} parent=11 // pred_check
          %p175 = pneg %p98
        $region18: #{tpu_custom_call.1} parent=11 // pred_check_branch
          %177 = sbr.rel (%p175) target = $region20
        $region19: #{tpu_custom_call.1} parent=11 // pred_region
          %s179 = ssub.s32 256, 256
          %180 = vsyncadd [#allocation6], %s179
          %s181 = sshll.u32 [#allocation7], 4
          %s182 = int_to_ptr.vmem [resolvable:$true] %s181
          %187 = dma.hbm_to_vmem [thread:$0]  %s2, 256, %s182, [#allocation6], 64, 64, 4
        $region20: #{tpu_custom_call.1} parent=11 // pred_fallthru
          _
        // Predicated region
        $region21: #{tpu_custom_call.1} parent=11 // pred_check
          %p188 = pneg %p119
        $region22: #{tpu_custom_call.1} parent=11 // pred_check_branch
          %190 = sbr.rel (%p188) target = $region24
        $region23: #{tpu_custom_call.1} parent=11 // pred_region
          %s192 = ssub.s32 256, 256
          %193 = vsyncadd [#allocation9], %s192
          %s194 = sshll.u32 [#allocation8], 4
          %s195 = int_to_ptr.vmem [resolvable:$true] %s194
          %200 = dma.hbm_to_vmem [thread:$0]  %s3, 256, %s195, [#allocation9], 64, 64, 4
        $region24: #{tpu_custom_call.1} parent=11 // pred_fallthru
          _
      $region12: #{tpu_custom_call.1} parent=5 // pred_fallthru
        _
      %p201 = scmp.lt.s32.totalorder %s18, 2
      // Predicated region
      $region25: #{tpu_custom_call.1} parent=5 // pred_check
        %p202 = pneg %p201
      $region26: #{tpu_custom_call.1} parent=5 // pred_check_branch
        %204 = sbr.rel (%p202) target = $region28
      $region27: #{tpu_custom_call.1} parent=5 // pred_region
        // Predicated region
        $region29: #{tpu_custom_call.1} parent=27 // pred_check
          %p205 = pneg %p50
        $region30: #{tpu_custom_call.1} parent=27 // pred_check_branch
          %207 = sbr.rel (%p205) target = $region32
        $region31: #{tpu_custom_call.1} parent=27 // pred_region
          %s208 = sand.u32 %s40, 1
          %s209 = scalar_lea.sflag [#allocation3], %s208
          %s210 = sand.u32 %s40, 1
          %s211 = smul.addr %s210, 4
          %s212 = scalar_lea.vmem [#allocation2], %s211
          %s214 = ssub.s32 64, 64
          %215 = vsyncadd %s209, %s214
          %s216 = smul.addr %s25, 64
          %s217 = scalar_lea.hbm %s0, %s216
          %s219 = sshll.u32 %s212, 4
          %s220 = int_to_ptr.vmem [resolvable:$true] %s219
          %222 = dma.hbm_to_vmem [thread:$0]  %s217, 64, %s220, %s209
        $region32: #{tpu_custom_call.1} parent=27 // pred_fallthru
          _
      $region28: #{tpu_custom_call.1} parent=5 // pred_fallthru
        _
      %p223 = scmp.le.s32.totalorder 1, %s18
      %p224 = scmp.lt.s32.totalorder %s18, 3
      %p225 = pnand %p223, %p224
      %p226 = pneg %p225
      // Predicated region
      $region33: #{tpu_custom_call.1} parent=5 // pred_check
        _
      $region34: #{tpu_custom_call.1} parent=5 // pred_check_branch
        %228 = sbr.rel (%p225) target = $region36
      $region35: #{tpu_custom_call.1} parent=5 // pred_region
        %s229 = ssub.s32 %s18, 1
        %s230 = sand.u32 %s43, 1
        %s231 = scalar_lea.sflag [#allocation3], %s230
        %s232 = sand.u32 %s43, 1
        %s233 = smul.addr %s232, 4
        %s234 = scalar_lea.vmem [#allocation2], %s233
        // Predicated region
        $region37: #{tpu_custom_call.1} parent=35 // pred_check
          %p235 = pneg %p56
        $region38: #{tpu_custom_call.1} parent=35 // pred_check_branch
          %237 = sbr.rel (%p235) target = $region40
        $region39: #{tpu_custom_call.1} parent=35 // pred_region
          %238 = dma.done %s231, 64
        $region40: #{tpu_custom_call.1} parent=35 // pred_fallthru
          _
        // Predicated region
        $region41: #{tpu_custom_call.1} parent=35 // pred_check
          %p239 = pneg %p77
        $region42: #{tpu_custom_call.1} parent=35 // pred_check_branch
          %241 = sbr.rel (%p239) target = $region44
        $region43: #{tpu_custom_call.1} parent=35 // pred_region
          %242 = dma.done [#allocation6], 256
        $region44: #{tpu_custom_call.1} parent=35 // pred_fallthru
          _
        // Predicated region
        $region45: #{tpu_custom_call.1} parent=35 // pred_check
          %p243 = pneg %p98
        $region46: #{tpu_custom_call.1} parent=35 // pred_check_branch
          %245 = sbr.rel (%p243) target = $region48
        $region47: #{tpu_custom_call.1} parent=35 // pred_region
          %246 = dma.done [#allocation6], 256
        $region48: #{tpu_custom_call.1} parent=35 // pred_fallthru
          _
        // Predicated region
        $region49: #{tpu_custom_call.1} parent=35 // pred_check
          %p247 = pneg %p119
        $region50: #{tpu_custom_call.1} parent=35 // pred_check_branch
          %249 = sbr.rel (%p247) target = $region52
        $region51: #{tpu_custom_call.1} parent=35 // pred_region
          %250 = dma.done [#allocation9], 256
        $region52: #{tpu_custom_call.1} parent=35 // pred_fallthru
          _
        %s251 = sand.u32 %s43, 1
        %s252 = scalar_lea.sflag [#allocation3], %s251
        %s253 = sand.u32 %s43, 1
        %s254 = smul.addr %s253, 4
        %s255 = scalar_lea.vmem [#allocation2], %s254
        %p256 = pneg %p56
        %p257 = pneg %p53
        %p258 = pneg %p77
        %p259 = pneg %p74
        %p260 = pneg %p98
        %p261 = pneg %p95
        %p262 = pneg %p119
        %p263 = pneg %p116
        %p264 = pneg %p147
        %p265 = pneg %p144
        %s266 = sand.u32 %s134, 1
        %s267 = scalar_lea.sflag [#allocation4], %s266
        %s268 = sand.u32 %s134, 1
        %s269 = smul.addr %s268, 8
        %s270 = scalar_lea.vmem [#allocation10], %s269
        %s272 = smul.u32 %s28, 8
        %v273 = vld [vmem:[%s234] sm:$0xf]
        %s274 = sshra.s32 %s272, 3
        %s275 = sand.u32 %s272, 7
        %s276 = smul.addr %s274, 4
        %s277 = scalar_lea.vmem %s234, %s276 [#allocation2]
        %v278 = vld [vmem:[%s277] sm:$0xf]
        %v279 = vld [vmem:[#allocation5] sm:$0xf]
        %v280 = vld [vmem:[#allocation5 + $0x4] sm:$0xf]
        %v281 = vld [vmem:[#allocation5 + $0x8] sm:$0xf]
        %v282 = vld [vmem:[#allocation5 + $0xc] sm:$0xf]
        %v287 = vunpack.c.l.b16 %v279
        %v288 = vunpack.c.l.b16 %v280
        %v289 = vunpack.c.l.b16 %v281
        %v290 = vunpack.c.l.b16 %v282
        %v291 = vpack.c.b16 %v288, %v287
        %v292 = vpack.c.b16 %v290, %v289
        %vm295 = vcmask 261120
        %v297 = vsel %vm295, %v278, 0
        %299 = vmatprep.subr.bf16.mxu0 0
        %300 = vmatpush1.bf16.msra.mxu0 0
        %301 = vmatprep.subr.bf16.mxu0 0
        %302 = vmatpush1.bf16.msra.mxu0 0
        %303 = vmatprep.subr.bf16.mxu0 0
        %304 = vmatpush1.bf16.msra.mxu0 0
        %305 = vmatprep.subr.bf16.mxu0 0
        %306 = vmatpush1.bf16.msra.mxu0 0
        %307 = vmatprep.subr.bf16.mxu0 0
        %308 = vmatpush1.bf16.msra.mxu0 0
        %309 = vmatprep.subr.bf16.mxu0 0
        %310 = vmatpush1.bf16.msra.mxu0 0
        %311 = vmatprep.subr.bf16.mxu0 0
        %312 = vmatpush1.bf16.msra.mxu0 %v292
        %313 = vmatprep.subr.bf16.mxu0 0
        %314 = vmatpush1.bf16.msra.mxu0 %v291
        %315 = vmatprep.subr.bf16.mxu0 0
        %316 = vmatpush2.bf16.msra.mxu0 0
        %317 = vmatprep.subr.bf16.mxu0 0
        %318 = vmatpush2.bf16.msra.mxu0 0
        %319 = vmatprep.subr.bf16.mxu0 0
        %320 = vmatpush2.bf16.msra.mxu0 0
        %321 = vmatprep.subr.bf16.mxu0 0
        %322 = vmatpush2.bf16.msra.mxu0 0
        %323 = vmatprep.subr.bf16.mxu0 0
        %324 = vmatpush2.bf16.msra.mxu0 0
        %325 = vmatprep.subr.bf16.mxu0 0
        %326 = vmatpush2.bf16.msra.mxu0 0
        %327 = vmatprep.subr.bf16.mxu0 0
        %328 = vmatpush2.bf16.msra.mxu0 0
        %329 = vmatprep.subr.bf16.mxu0 0
        %330 = vmatpush2.bf16.msra.mxu0 0
        %331 = vmatprep.mubr.bf16.mxu0 0
        %332 = vmatmul.mubr.bf16.gmra.mxu0 %v297
        %v333 = vpop.f32.mrf.mxu0
        %v334 = vadd.f32 0.0, %v333
        %v335 = vpop.f32.mrf.mxu0
        %v336 = vpop.f32.mrf.mxu0
        %v337 = vpop.f32.mrf.mxu0
        %338 = vdwg.mxu0
        %v339 = vld [vmem:[#allocation7] sm:$0xf]
        %v340 = vld [vmem:[#allocation7 + $0x4] sm:$0xf]
        %v341 = vld [vmem:[#allocation7 + $0x8] sm:$0xf]
        %v342 = vld [vmem:[#allocation7 + $0xc] sm:$0xf]
        %v347 = vunpack.c.l.b16 %v339
        %v348 = vunpack.c.l.b16 %v340
        %v349 = vunpack.c.l.b16 %v341
        %v350 = vunpack.c.l.b16 %v342
        %v351 = vpack.c.b16 %v348, %v347
        %v352 = vpack.c.b16 %v350, %v349
        %v356 = vsel %vm295, %v273, 0
        %358 = vmatprep.subr.bf16.mxu0 0
        %359 = vmatpush1.bf16.msra.mxu0 0
        %360 = vmatprep.subr.bf16.mxu0 0
        %361 = vmatpush1.bf16.msra.mxu0 0
        %362 = vmatprep.subr.bf16.mxu0 0
        %363 = vmatpush1.bf16.msra.mxu0 0
        %364 = vmatprep.subr.bf16.mxu0 0
        %365 = vmatpush1.bf16.msra.mxu0 0
        %366 = vmatprep.subr.bf16.mxu0 0
        %367 = vmatpush1.bf16.msra.mxu0 0
        %368 = vmatprep.subr.bf16.mxu0 0
        %369 = vmatpush1.bf16.msra.mxu0 0
        %370 = vmatprep.subr.bf16.mxu0 0
        %371 = vmatpush1.bf16.msra.mxu0 %v352
        %372 = vmatprep.subr.bf16.mxu0 0
        %373 = vmatpush1.bf16.msra.mxu0 %v351
        %374 = vmatprep.subr.bf16.mxu0 0
        %375 = vmatpush2.bf16.msra.mxu0 0
        %376 = vmatprep.subr.bf16.mxu0 0
        %377 = vmatpush2.bf16.msra.mxu0 0
        %378 = vmatprep.subr.bf16.mxu0 0
        %379 = vmatpush2.bf16.msra.mxu0 0
        %380 = vmatprep.subr.bf16.mxu0 0
        %381 = vmatpush2.bf16.msra.mxu0 0
        %382 = vmatprep.subr.bf16.mxu0 0
        %383 = vmatpush2.bf16.msra.mxu0 0
        %384 = vmatprep.subr.bf16.mxu0 0
        %385 = vmatpush2.bf16.msra.mxu0 0
        %386 = vmatprep.subr.bf16.mxu0 0
        %387 = vmatpush2.bf16.msra.mxu0 0
        %388 = vmatprep.subr.bf16.mxu0 0
        %389 = vmatpush2.bf16.msra.mxu0 0
        %390 = vmatprep.mubr.bf16.mxu0 0
        %391 = vmatmul.mubr.bf16.gmra.mxu0 %v356
        %v392 = vpop.f32.mrf.mxu0
        %v393 = vadd.f32 0.0, %v392
        %v394 = vpop.f32.mrf.mxu0
        %v395 = vpop.f32.mrf.mxu0
        %v396 = vpop.f32.mrf.mxu0
        %397 = vdwg.mxu0
        %v398 = vpack.c.bf16 %v334, %v334
        %400 = vrot.lane.b32.xlu0 %v398, 120
        %v401 = vpop.permute.xlu0 %400
        %402 = vrot.lane.b32.xlu0 %v398, 112
        %v403 = vpop.permute.xlu0 %402
        %404 = vrot.lane.b32.xlu0 %v398, 104
        %v405 = vpop.permute.xlu0 %404
        %v407 = vunpack.c.l.s4 1983009808
        %v408 = vunpack.c.0.s8 %v407
        %v409 = vlaneseq
        %v410 = vshrl.u32 %v409, 7
        %v411 = vsub.s32 %v408, %v410
        %v412 = vrot.slane %v398, %v411
        %v415 = vunpack.c.l.s4 1983009808
        %v416 = vunpack.c.0.s8 %v415
        %v417 = vlaneseq
        %v418 = vshrl.u32 %v417, 7
        %v419 = vsub.s32 %v416, %v418
        %v420 = vrot.slane %v403, %v419
        %v421 = vcombine.low %v412, %v420
        %v422 = vcombine.high %v412, %v420
        %v424 = vunpack.c.l.s4 1934713408
        %v425 = vunpack.c.0.s8 %v424
        %v426 = vlaneseq
        %v427 = vshrl.u32 %v426, 7
        %v428 = vsub.s32 %v425, %v427
        %v429 = vrot.slane %v421, %v428
        %v431 = vunpack.c.l.s4 1934713408
        %v432 = vunpack.c.0.s8 %v431
        %v433 = vlaneseq
        %v434 = vshrl.u32 %v433, 7
        %v435 = vsub.s32 %v432, %v434
        %v436 = vrot.slane %v422, %v435
        %v437 = vcombine.high %v429, 0
        %v438 = vcombine.high %v436, 0
        %v441 = vunpack.c.l.s4 1983009808
        %v442 = vunpack.c.0.s8 %v441
        %v443 = vlaneseq
        %v444 = vshrl.u32 %v443, 7
        %v445 = vsub.s32 %v442, %v444
        %v446 = vrot.slane %v401, %v445
        %v449 = vunpack.c.l.s4 1983009808
        %v450 = vunpack.c.0.s8 %v449
        %v451 = vlaneseq
        %v452 = vshrl.u32 %v451, 7
        %v453 = vsub.s32 %v450, %v452
        %v454 = vrot.slane %v405, %v453
        %v455 = vcombine.low %v446, %v454
        %v456 = vcombine.high %v446, %v454
        %v458 = vunpack.c.l.s4 1934713408
        %v459 = vunpack.c.0.s8 %v458
        %v460 = vlaneseq
        %v461 = vshrl.u32 %v460, 7
        %v462 = vsub.s32 %v459, %v461
        %v463 = vrot.slane %v455, %v462
        %v465 = vunpack.c.l.s4 1934713408
        %v466 = vunpack.c.0.s8 %v465
        %v467 = vlaneseq
        %v468 = vshrl.u32 %v467, 7
        %v469 = vsub.s32 %v466, %v468
        %v470 = vrot.slane %v456, %v469
        %v471 = vcombine.high %v463, 0
        %v472 = vcombine.high %v470, 0
        %v475 = vpack.i.b16 %v463, %v429
        %v477 = vshrl.u32 %v429, 16
        %v478 = vshrl.u32 %v463, 16
        %v479 = vpack.i.b16 %v478, %v477
        %v483 = vpack.i.b16 %v471, %v437
        %v485 = vshrl.u32 %v437, 16
        %v486 = vshrl.u32 %v471, 16
        %v487 = vpack.i.b16 %v486, %v485
        %v491 = vpack.i.b16 %v470, %v436
        %v493 = vshrl.u32 %v436, 16
        %v494 = vshrl.u32 %v470, 16
        %v495 = vpack.i.b16 %v494, %v493
        %v499 = vpack.i.b16 %v472, %v438
        %v501 = vshrl.u32 %v438, 16
        %v502 = vshrl.u32 %v472, 16
        %v503 = vpack.i.b16 %v502, %v501
        %v505 = vcombine.low %v475, %v491
        %v507 = vunpack.c.l.s4 1983009808
        %v508 = vunpack.c.0.s8 %v507
        %v509 = vlaneseq
        %v510 = vshrl.u32 %v509, 7
        %v511 = vsub.s32 %v508, %v510
        %v512 = vrot.slane %v505, %v511
        %v513 = vcombine.low %v483, %v499
        %v515 = vunpack.c.l.s4 1983009808
        %v516 = vunpack.c.0.s8 %v515
        %v517 = vlaneseq
        %v518 = vshrl.u32 %v517, 7
        %v519 = vsub.s32 %v516, %v518
        %v520 = vrot.slane %v513, %v519
        %v521 = vcombine.low %v512, %v520
        %v523 = vunpack.c.l.s4 1934713408
        %v524 = vunpack.c.0.s8 %v523
        %v525 = vlaneseq
        %v526 = vshrl.u32 %v525, 7
        %v527 = vsub.s32 %v524, %v526
        %v528 = vrot.slane %v521, %v527
        %v529 = vcombine.high %v528, 0
        %v530 = vcombine.low %v479, %v495
        %v532 = vunpack.c.l.s4 1983009808
        %v533 = vunpack.c.0.s8 %v532
        %v534 = vlaneseq
        %v535 = vshrl.u32 %v534, 7
        %v536 = vsub.s32 %v533, %v535
        %v537 = vrot.slane %v530, %v536
        %v538 = vcombine.low %v487, %v503
        %v540 = vunpack.c.l.s4 1983009808
        %v541 = vunpack.c.0.s8 %v540
        %v542 = vlaneseq
        %v543 = vshrl.u32 %v542, 7
        %v544 = vsub.s32 %v541, %v543
        %v545 = vrot.slane %v538, %v544
        %v546 = vcombine.low %v537, %v545
        %v548 = vunpack.c.l.s4 1934713408
        %v549 = vunpack.c.0.s8 %v548
        %v550 = vlaneseq
        %v551 = vshrl.u32 %v550, 7
        %v552 = vsub.s32 %v549, %v551
        %v553 = vrot.slane %v546, %v552
        %v554 = vcombine.high %v553, 0
        %v557 = vpack.i.b16 %v553, %v528
        %v558 = vshrl.u32 %v528, 16
        %v559 = vshrl.u32 %v553, 16
        %v560 = vpack.i.b16 %v559, %v558
        %v563 = vpack.i.b16 %v554, %v529
        %v564 = vshrl.u32 %v529, 16
        %v565 = vshrl.u32 %v554, 16
        %v566 = vpack.i.b16 %v565, %v564
        %v567 = vpack.c.bf16 %v393, %v393
        %569 = vrot.lane.b32.xlu0 %v567, 120
        %v570 = vpop.permute.xlu0 %569
        %571 = vrot.lane.b32.xlu0 %v567, 112
        %v572 = vpop.permute.xlu0 %571
        %573 = vrot.lane.b32.xlu0 %v567, 104
        %v574 = vpop.permute.xlu0 %573
        %v576 = vunpack.c.l.s4 1983009808
        %v577 = vunpack.c.0.s8 %v576
        %v578 = vlaneseq
        %v579 = vshrl.u32 %v578, 7
        %v580 = vsub.s32 %v577, %v579
        %v581 = vrot.slane %v567, %v580
        %v584 = vunpack.c.l.s4 1983009808
        %v585 = vunpack.c.0.s8 %v584
        %v586 = vlaneseq
        %v587 = vshrl.u32 %v586, 7
        %v588 = vsub.s32 %v585, %v587
        %v589 = vrot.slane %v572, %v588
        %v590 = vcombine.low %v581, %v589
        %v591 = vcombine.high %v581, %v589
        %v593 = vunpack.c.l.s4 1934713408
        %v594 = vunpack.c.0.s8 %v593
        %v595 = vlaneseq
        %v596 = vshrl.u32 %v595, 7
        %v597 = vsub.s32 %v594, %v596
        %v598 = vrot.slane %v590, %v597
        %v600 = vunpack.c.l.s4 1934713408
        %v601 = vunpack.c.0.s8 %v600
        %v602 = vlaneseq
        %v603 = vshrl.u32 %v602, 7
        %v604 = vsub.s32 %v601, %v603
        %v605 = vrot.slane %v591, %v604
        %v606 = vcombine.high %v598, 0
        %v607 = vcombine.high %v605, 0
        %v610 = vunpack.c.l.s4 1983009808
        %v611 = vunpack.c.0.s8 %v610
        %v612 = vlaneseq
        %v613 = vshrl.u32 %v612, 7
        %v614 = vsub.s32 %v611, %v613
        %v615 = vrot.slane %v570, %v614
        %v618 = vunpack.c.l.s4 1983009808
        %v619 = vunpack.c.0.s8 %v618
        %v620 = vlaneseq
        %v621 = vshrl.u32 %v620, 7
        %v622 = vsub.s32 %v619, %v621
        %v623 = vrot.slane %v574, %v622
        %v624 = vcombine.low %v615, %v623
        %v625 = vcombine.high %v615, %v623
        %v627 = vunpack.c.l.s4 1934713408
        %v628 = vunpack.c.0.s8 %v627
        %v629 = vlaneseq
        %v630 = vshrl.u32 %v629, 7
        %v631 = vsub.s32 %v628, %v630
        %v632 = vrot.slane %v624, %v631
        %v634 = vunpack.c.l.s4 1934713408
        %v635 = vunpack.c.0.s8 %v634
        %v636 = vlaneseq
        %v637 = vshrl.u32 %v636, 7
        %v638 = vsub.s32 %v635, %v637
        %v639 = vrot.slane %v625, %v638
        %v640 = vcombine.high %v632, 0
        %v641 = vcombine.high %v639, 0
        %v644 = vpack.i.b16 %v632, %v598
        %v646 = vshrl.u32 %v598, 16
        %v647 = vshrl.u32 %v632, 16
        %v648 = vpack.i.b16 %v647, %v646
        %v652 = vpack.i.b16 %v640, %v606
        %v654 = vshrl.u32 %v606, 16
        %v655 = vshrl.u32 %v640, 16
        %v656 = vpack.i.b16 %v655, %v654
        %v660 = vpack.i.b16 %v639, %v605
        %v662 = vshrl.u32 %v605, 16
        %v663 = vshrl.u32 %v639, 16
        %v664 = vpack.i.b16 %v663, %v662
        %v668 = vpack.i.b16 %v641, %v607
        %v670 = vshrl.u32 %v607, 16
        %v671 = vshrl.u32 %v641, 16
        %v672 = vpack.i.b16 %v671, %v670
        %v674 = vcombine.low %v644, %v660
        %v676 = vunpack.c.l.s4 1983009808
        %v677 = vunpack.c.0.s8 %v676
        %v678 = vlaneseq
        %v679 = vshrl.u32 %v678, 7
        %v680 = vsub.s32 %v677, %v679
        %v681 = vrot.slane %v674, %v680
        %v682 = vcombine.low %v652, %v668
        %v684 = vunpack.c.l.s4 1983009808
        %v685 = vunpack.c.0.s8 %v684
        %v686 = vlaneseq
        %v687 = vshrl.u32 %v686, 7
        %v688 = vsub.s32 %v685, %v687
        %v689 = vrot.slane %v682, %v688
        %v690 = vcombine.low %v681, %v689
        %v692 = vunpack.c.l.s4 1934713408
        %v693 = vunpack.c.0.s8 %v692
        %v694 = vlaneseq
        %v695 = vshrl.u32 %v694, 7
        %v696 = vsub.s32 %v693, %v695
        %v697 = vrot.slane %v690, %v696
        %v698 = vcombine.high %v697, 0
        %v699 = vcombine.low %v648, %v664
        %v701 = vunpack.c.l.s4 1983009808
        %v702 = vunpack.c.0.s8 %v701
        %v703 = vlaneseq
        %v704 = vshrl.u32 %v703, 7
        %v705 = vsub.s32 %v702, %v704
        %v706 = vrot.slane %v699, %v705
        %v707 = vcombine.low %v656, %v672
        %v709 = vunpack.c.l.s4 1983009808
        %v710 = vunpack.c.0.s8 %v709
        %v711 = vlaneseq
        %v712 = vshrl.u32 %v711, 7
        %v713 = vsub.s32 %v710, %v712
        %v714 = vrot.slane %v707, %v713
        %v715 = vcombine.low %v706, %v714
        %v717 = vunpack.c.l.s4 1934713408
        %v718 = vunpack.c.0.s8 %v717
        %v719 = vlaneseq
        %v720 = vshrl.u32 %v719, 7
        %v721 = vsub.s32 %v718, %v720
        %v722 = vrot.slane %v715, %v721
        %v723 = vcombine.high %v722, 0
        %v726 = vpack.i.b16 %v722, %v697
        %v727 = vshrl.u32 %v697, 16
        %v728 = vshrl.u32 %v722, 16
        %v729 = vpack.i.b16 %v728, %v727
        %v732 = vpack.i.b16 %v723, %v698
        %v733 = vshrl.u32 %v698, 16
        %v734 = vshrl.u32 %v723, 16
        %v735 = vpack.i.b16 %v734, %v733
        %736 = vrot.lane.b32.xlu0 %v567, 96
        %v737 = vpop.permute.xlu0 %736
        %738 = vrot.lane.b32.xlu0 %v570, 96
        %v739 = vpop.permute.xlu0 %738
        %740 = vrot.lane.b32.xlu0 %v572, 96
        %v741 = vpop.permute.xlu0 %740
        %742 = vrot.lane.b32.xlu0 %v574, 96
        %v743 = vpop.permute.xlu0 %742
        %v746 = vunpack.c.l.s4 1983009808
        %v747 = vunpack.c.0.s8 %v746
        %v748 = vlaneseq
        %v749 = vshrl.u32 %v748, 7
        %v750 = vsub.s32 %v747, %v749
        %v751 = vrot.slane %v737, %v750
        %v754 = vunpack.c.l.s4 1983009808
        %v755 = vunpack.c.0.s8 %v754
        %v756 = vlaneseq
        %v757 = vshrl.u32 %v756, 7
        %v758 = vsub.s32 %v755, %v757
        %v759 = vrot.slane %v741, %v758
        %v760 = vcombine.low %v751, %v759
        %v761 = vcombine.high %v751, %v759
        %v763 = vunpack.c.l.s4 1934713408
        %v764 = vunpack.c.0.s8 %v763
        %v765 = vlaneseq
        %v766 = vshrl.u32 %v765, 7
        %v767 = vsub.s32 %v764, %v766
        %v768 = vrot.slane %v760, %v767
        %v770 = vunpack.c.l.s4 1934713408
        %v771 = vunpack.c.0.s8 %v770
        %v772 = vlaneseq
        %v773 = vshrl.u32 %v772, 7
        %v774 = vsub.s32 %v771, %v773
        %v775 = vrot.slane %v761, %v774
        %v776 = vcombine.high %v768, 0
        %v777 = vcombine.high %v775, 0
        %v780 = vunpack.c.l.s4 1983009808
        %v781 = vunpack.c.0.s8 %v780
        %v782 = vlaneseq
        %v783 = vshrl.u32 %v782, 7
        %v784 = vsub.s32 %v781, %v783
        %v785 = vrot.slane %v739, %v784
        %v788 = vunpack.c.l.s4 1983009808
        %v789 = vunpack.c.0.s8 %v788
        %v790 = vlaneseq
        %v791 = vshrl.u32 %v790, 7
        %v792 = vsub.s32 %v789, %v791
        %v793 = vrot.slane %v743, %v792
        %v794 = vcombine.low %v785, %v793
        %v795 = vcombine.high %v785, %v793
        %v797 = vunpack.c.l.s4 1934713408
        %v798 = vunpack.c.0.s8 %v797
        %v799 = vlaneseq
        %v800 = vshrl.u32 %v799, 7
        %v801 = vsub.s32 %v798, %v800
        %v802 = vrot.slane %v794, %v801
        %v804 = vunpack.c.l.s4 1934713408
        %v805 = vunpack.c.0.s8 %v804
        %v806 = vlaneseq
        %v807 = vshrl.u32 %v806, 7
        %v808 = vsub.s32 %v805, %v807
        %v809 = vrot.slane %v795, %v808
        %v810 = vcombine.high %v802, 0
        %v811 = vcombine.high %v809, 0
        %v814 = vpack.i.b16 %v802, %v768
        %v816 = vshrl.u32 %v768, 16
        %v817 = vshrl.u32 %v802, 16
        %v818 = vpack.i.b16 %v817, %v816
        %v822 = vpack.i.b16 %v810, %v776
        %v824 = vshrl.u32 %v776, 16
        %v825 = vshrl.u32 %v810, 16
        %v826 = vpack.i.b16 %v825, %v824
        %v830 = vpack.i.b16 %v809, %v775
        %v832 = vshrl.u32 %v775, 16
        %v833 = vshrl.u32 %v809, 16
        %v834 = vpack.i.b16 %v833, %v832
        %v838 = vpack.i.b16 %v811, %v777
        %v840 = vshrl.u32 %v777, 16
        %v841 = vshrl.u32 %v811, 16
        %v842 = vpack.i.b16 %v841, %v840
        %v844 = vcombine.low %v814, %v830
        %v846 = vunpack.c.l.s4 1983009808
        %v847 = vunpack.c.0.s8 %v846
        %v848 = vlaneseq
        %v849 = vshrl.u32 %v848, 7
        %v850 = vsub.s32 %v847, %v849
        %v851 = vrot.slane %v844, %v850
        %v852 = vcombine.low %v822, %v838
        %v854 = vunpack.c.l.s4 1983009808
        %v855 = vunpack.c.0.s8 %v854
        %v856 = vlaneseq
        %v857 = vshrl.u32 %v856, 7
        %v858 = vsub.s32 %v855, %v857
        %v859 = vrot.slane %v852, %v858
        %v860 = vcombine.low %v851, %v859
        %v862 = vunpack.c.l.s4 1934713408
        %v863 = vunpack.c.0.s8 %v862
        %v864 = vlaneseq
        %v865 = vshrl.u32 %v864, 7
        %v866 = vsub.s32 %v863, %v865
        %v867 = vrot.slane %v860, %v866
        %v868 = vcombine.high %v867, 0
        %v869 = vcombine.low %v818, %v834
        %v871 = vunpack.c.l.s4 1983009808
        %v872 = vunpack.c.0.s8 %v871
        %v873 = vlaneseq
        %v874 = vshrl.u32 %v873, 7
        %v875 = vsub.s32 %v872, %v874
        %v876 = vrot.slane %v869, %v875
        %v877 = vcombine.low %v826, %v842
        %v879 = vunpack.c.l.s4 1983009808
        %v880 = vunpack.c.0.s8 %v879
        %v881 = vlaneseq
        %v882 = vshrl.u32 %v881, 7
        %v883 = vsub.s32 %v880, %v882
        %v884 = vrot.slane %v877, %v883
        %v885 = vcombine.low %v876, %v884
        %v887 = vunpack.c.l.s4 1934713408
        %v888 = vunpack.c.0.s8 %v887
        %v889 = vlaneseq
        %v890 = vshrl.u32 %v889, 7
        %v891 = vsub.s32 %v888, %v890
        %v892 = vrot.slane %v885, %v891
        %v893 = vcombine.high %v892, 0
        %v896 = vpack.i.b16 %v892, %v867
        %v897 = vshrl.u32 %v867, 16
        %v898 = vshrl.u32 %v892, 16
        %v899 = vpack.i.b16 %v898, %v897
        %v902 = vpack.i.b16 %v893, %v868
        %v903 = vshrl.u32 %v868, 16
        %v904 = vshrl.u32 %v893, 16
        %v905 = vpack.i.b16 %v904, %v903
        %vm906 = vcmask 64512
        %v908 = vsel %vm906, %v557, 0
        %v911 = vsel %vm906, %v726, 0
        %913 = vmatprep.subr.bf16.mxu0 0
        %914 = vmatpush1.bf16.xpose.msra.mxu0 0
        %915 = vmatprep.subr.bf16.mxu0 0
        %916 = vmatpush1.bf16.xpose.msra.mxu0 0
        %917 = vmatprep.subr.bf16.mxu0 0
        %918 = vmatpush1.bf16.xpose.msra.mxu0 0
        %919 = vmatprep.subr.bf16.mxu0 0
        %920 = vmatpush1.bf16.xpose.msra.mxu0 0
        %921 = vmatprep.subr.bf16.mxu0 0
        %922 = vmatpush1.bf16.xpose.msra.mxu0 0
        %923 = vmatprep.subr.bf16.mxu0 0
        %924 = vmatpush1.bf16.xpose.msra.mxu0 0
        %925 = vmatprep.subr.bf16.mxu0 0
        %926 = vmatpush1.bf16.xpose.msra.mxu0 0
        %927 = vmatprep.subr.bf16.mxu0 0
        %928 = vmatpush1.bf16.xpose.msra.mxu0 %v911
        %929 = vmatprep.subr.bf16.mxu0 0
        %930 = vmatpush2.bf16.xpose.msra.mxu0 0
        %931 = vmatprep.subr.bf16.mxu0 0
        %932 = vmatpush2.bf16.xpose.msra.mxu0 0
        %933 = vmatprep.subr.bf16.mxu0 0
        %934 = vmatpush2.bf16.xpose.msra.mxu0 0
        %935 = vmatprep.subr.bf16.mxu0 0
        %936 = vmatpush2.bf16.xpose.msra.mxu0 0
        %937 = vmatprep.subr.bf16.mxu0 0
        %938 = vmatpush2.bf16.xpose.msra.mxu0 0
        %939 = vmatprep.subr.bf16.mxu0 0
        %940 = vmatpush2.bf16.xpose.msra.mxu0 0
        %941 = vmatprep.subr.bf16.mxu0 0
        %942 = vmatpush2.bf16.xpose.msra.mxu0 0
        %943 = vmatprep.subr.bf16.mxu0 0
        %944 = vmatpush2.bf16.xpose.msra.mxu0 0
        %945 = vmatprep.mubr.bf16.mxu0 0
        %946 = vmatmul.mubr.bf16.gmra.mxu0 %v908
        %v947 = vpop.f32.mrf.mxu0
        %v948 = vadd.f32 0.0, %v947
        %v949 = vpop.f32.mrf.mxu0
        %v950 = vpop.f32.mrf.mxu0
        %v951 = vpop.f32.mrf.mxu0
        %952 = vdwg.mxu0
        %v954 = vsel %vm906, %v560, 0
        %v957 = vsel %vm906, %v729, 0
        %959 = vmatprep.subr.bf16.mxu0 0
        %960 = vmatpush1.bf16.xpose.msra.mxu0 0
        %961 = vmatprep.subr.bf16.mxu0 0
        %962 = vmatpush1.bf16.xpose.msra.mxu0 0
        %963 = vmatprep.subr.bf16.mxu0 0
        %964 = vmatpush1.bf16.xpose.msra.mxu0 0
        %965 = vmatprep.subr.bf16.mxu0 0
        %966 = vmatpush1.bf16.xpose.msra.mxu0 0
        %967 = vmatprep.subr.bf16.mxu0 0
        %968 = vmatpush1.bf16.xpose.msra.mxu0 0
        %969 = vmatprep.subr.bf16.mxu0 0
        %970 = vmatpush1.bf16.xpose.msra.mxu0 0
        %971 = vmatprep.subr.bf16.mxu0 0
        %972 = vmatpush1.bf16.xpose.msra.mxu0 0
        %973 = vmatprep.subr.bf16.mxu0 0
        %974 = vmatpush1.bf16.xpose.msra.mxu0 %v957
        %975 = vmatprep.subr.bf16.mxu0 0
        %976 = vmatpush2.bf16.xpose.msra.mxu0 0
        %977 = vmatprep.subr.bf16.mxu0 0
        %978 = vmatpush2.bf16.xpose.msra.mxu0 0
        %979 = vmatprep.subr.bf16.mxu0 0
        %980 = vmatpush2.bf16.xpose.msra.mxu0 0
        %981 = vmatprep.subr.bf16.mxu0 0
        %982 = vmatpush2.bf16.xpose.msra.mxu0 0
        %983 = vmatprep.subr.bf16.mxu0 0
        %984 = vmatpush2.bf16.xpose.msra.mxu0 0
        %985 = vmatprep.subr.bf16.mxu0 0
        %986 = vmatpush2.bf16.xpose.msra.mxu0 0
        %987 = vmatprep.subr.bf16.mxu0 0
        %988 = vmatpush2.bf16.xpose.msra.mxu0 0
        %989 = vmatprep.subr.bf16.mxu0 0
        %990 = vmatpush2.bf16.xpose.msra.mxu0 0
        %991 = vmatprep.mubr.bf16.mxu0 0
        %992 = vmatmul.mubr.bf16.gmra.mxu0 %v954
        %v993 = vpop.f32.mrf.mxu0
        %v994 = vadd.f32 0.0, %v993
        %v995 = vpop.f32.mrf.mxu0
        %v996 = vpop.f32.mrf.mxu0
        %v997 = vpop.f32.mrf.mxu0
        %998 = vdwg.mxu0
        %v1000 = vsel %vm906, %v563, 0
        %v1003 = vsel %vm906, %v732, 0
        %1005 = vmatprep.subr.bf16.mxu0 0
        %1006 = vmatpush1.bf16.xpose.msra.mxu0 0
        %1007 = vmatprep.subr.bf16.mxu0 0
        %1008 = vmatpush1.bf16.xpose.msra.mxu0 0
        %1009 = vmatprep.subr.bf16.mxu0 0
        %1010 = vmatpush1.bf16.xpose.msra.mxu0 0
        %1011 = vmatprep.subr.bf16.mxu0 0
        %1012 = vmatpush1.bf16.xpose.msra.mxu0 0
        %1013 = vmatprep.subr.bf16.mxu0 0
        %1014 = vmatpush1.bf16.xpose.msra.mxu0 0
        %1015 = vmatprep.subr.bf16.mxu0 0
        %1016 = vmatpush1.bf16.xpose.msra.mxu0 0
        %1017 = vmatprep.subr.bf16.mxu0 0
        %1018 = vmatpush1.bf16.xpose.msra.mxu0 0
        %1019 = vmatprep.subr.bf16.mxu0 0
        %1020 = vmatpush1.bf16.xpose.msra.mxu0 %v1003
        %1021 = vmatprep.subr.bf16.mxu0 0
        %1022 = vmatpush2.bf16.xpose.msra.mxu0 0
        %1023 = vmatprep.subr.bf16.mxu0 0
        %1024 = vmatpush2.bf16.xpose.msra.mxu0 0
        %1025 = vmatprep.subr.bf16.mxu0 0
        %1026 = vmatpush2.bf16.xpose.msra.mxu0 0
        %1027 = vmatprep.subr.bf16.mxu0 0
        %1028 = vmatpush2.bf16.xpose.msra.mxu0 0
        %1029 = vmatprep.subr.bf16.mxu0 0
        %1030 = vmatpush2.bf16.xpose.msra.mxu0 0
        %1031 = vmatprep.subr.bf16.mxu0 0
        %1032 = vmatpush2.bf16.xpose.msra.mxu0 0
        %1033 = vmatprep.subr.bf16.mxu0 0
        %1034 = vmatpush2.bf16.xpose.msra.mxu0 0
        %1035 = vmatprep.subr.bf16.mxu0 0
        %1036 = vmatpush2.bf16.xpose.msra.mxu0 0
        %1037 = vmatprep.mubr.bf16.mxu0 0
        %1038 = vmatmul.mubr.bf16.gmra.mxu0 %v1000
        %v1039 = vpop.f32.mrf.mxu0
        %v1040 = vadd.f32 0.0, %v1039
        %v1041 = vpop.f32.mrf.mxu0
        %v1042 = vpop.f32.mrf.mxu0
        %v1043 = vpop.f32.mrf.mxu0
        %1044 = vdwg.mxu0
        %v1046 = vsel %vm906, %v566, 0
        %v1049 = vsel %vm906, %v735, 0
        %1051 = vmatprep.subr.bf16.mxu0 0
        %1052 = vmatpush1.bf16.xpose.msra.mxu0 0
        %1053 = vmatprep.subr.bf16.mxu0 0
        %1054 = vmatpush1.bf16.xpose.msra.mxu0 0
        %1055 = vmatprep.subr.bf16.mxu0 0
        %1056 = vmatpush1.bf16.xpose.msra.mxu0 0
        %1057 = vmatprep.subr.bf16.mxu0 0
        %1058 = vmatpush1.bf16.xpose.msra.mxu0 0
        %1059 = vmatprep.subr.bf16.mxu0 0
        %1060 = vmatpush1.bf16.xpose.msra.mxu0 0
        %1061 = vmatprep.subr.bf16.mxu0 0
        %1062 = vmatpush1.bf16.xpose.msra.mxu0 0
        %1063 = vmatprep.subr.bf16.mxu0 0
        %1064 = vmatpush1.bf16.xpose.msra.mxu0 0
        %1065 = vmatprep.subr.bf16.mxu0 0
        %1066 = vmatpush1.bf16.xpose.msra.mxu0 %v1049
        %1067 = vmatprep.subr.bf16.mxu0 0
        %1068 = vmatpush2.bf16.xpose.msra.mxu0 0
        %1069 = vmatprep.subr.bf16.mxu0 0
        %1070 = vmatpush2.bf16.xpose.msra.mxu0 0
        %1071 = vmatprep.subr.bf16.mxu0 0
        %1072 = vmatpush2.bf16.xpose.msra.mxu0 0
        %1073 = vmatprep.subr.bf16.mxu0 0
        %1074 = vmatpush2.bf16.xpose.msra.mxu0 0
        %1075 = vmatprep.subr.bf16.mxu0 0
        %1076 = vmatpush2.bf16.xpose.msra.mxu0 0
        %1077 = vmatprep.subr.bf16.mxu0 0
        %1078 = vmatpush2.bf16.xpose.msra.mxu0 0
        %1079 = vmatprep.subr.bf16.mxu0 0
        %1080 = vmatpush2.bf16.xpose.msra.mxu0 0
        %1081 = vmatprep.subr.bf16.mxu0 0
        %1082 = vmatpush2.bf16.xpose.msra.mxu0 0
        %1083 = vmatprep.mubr.bf16.mxu0 0
        %1084 = vmatmul.mubr.bf16.gmra.mxu0 %v1046
        %v1085 = vpop.f32.mrf.mxu0
        %v1086 = vadd.f32 0.0, %v1085
        %v1087 = vpop.f32.mrf.mxu0
        %v1088 = vpop.f32.mrf.mxu0
        %v1089 = vpop.f32.mrf.mxu0
        %1090 = vdwg.mxu0
        %v1091 = vlaneseq
        %v1092 = vshrl.u32 %v1091, 7
        %v1093 = vstv %s272
        %v1094 = vadd.s32 %v1093, %v1092
        %v1095 = vlaneseq
        %v1096 = vand.u32 %v1095, 127
        %vm1097 = vcmp.ge.s32.totalorder %v1094, %v1096
        %v1098 = vsel %vm1097, 1, 0
        %vm1099 = vcmp.eq.s32.totalorder %v1098, 1
        %v1100 = vsel %vm1099, %v948, -1e+30
        %v1101 = vsel %vm1099, %v994, -1e+30
        %v1102 = vsel %vm1099, %v1040, -1e+30
        %v1103 = vsel %vm1099, %v1086, -1e+30
        %v1104 = vsel %vm906, %v1100, -inf
        %1105 = vmax.xlane.f32.xlu0 %v1104
        %v1106 = vpop.xlane.xlu0 %1105
        %v1107 = vsel %vm906, %v1101, -inf
        %1108 = vmax.xlane.f32.xlu0 %v1107
        %v1109 = vpop.xlane.xlu0 %1108
        %v1110 = vsel %vm906, %v1102, -inf
        %1111 = vmax.xlane.f32.xlu0 %v1110
        %v1112 = vpop.xlane.xlu0 %1111
        %v1113 = vsel %vm906, %v1103, -inf
        %1114 = vmax.xlane.f32.xlu0 %v1113
        %v1115 = vpop.xlane.xlu0 %1114
        %v1116 = vsub.f32 %v1100, %v1106
        %v1117 = vsub.f32 %v1101, %v1109
        %v1118 = vsub.f32 %v1102, %v1112
        %v1119 = vsub.f32 %v1103, %v1115
        %v1120 = vmul.f32 %v1116, 1.442695
        %v1121 = vpow.pop %v1120
        %v1122 = vmul.f32 %v1117, 1.442695
        %v1123 = vpow.pop %v1122
        %v1124 = vmul.f32 %v1118, 1.442695
        %v1125 = vpow.pop %v1124
        %v1126 = vmul.f32 %v1119, 1.442695
        %v1127 = vpow.pop %v1126
        %v1128 = vsel %vm906, %v1121, 0.0
        %1129 = vadd.xlane.f32.xlu0 %v1128
        %v1130 = vpop.xlane.xlu0 %1129
        %v1131 = vsel %vm906, %v1123, 0.0
        %1132 = vadd.xlane.f32.xlu0 %v1131
        %v1133 = vpop.xlane.xlu0 %1132
        %v1134 = vsel %vm906, %v1125, 0.0
        %1135 = vadd.xlane.f32.xlu0 %v1134
        %v1136 = vpop.xlane.xlu0 %1135
        %v1137 = vsel %vm906, %v1127, 0.0
        %1138 = vadd.xlane.f32.xlu0 %v1137
        %v1139 = vpop.xlane.xlu0 %1138
        %v1140 = vpack.c.bf16 %v1121, %v1121
        %v1141 = vpack.c.bf16 %v1123, %v1123
        %v1142 = vpack.c.bf16 %v1125, %v1125
        %v1143 = vpack.c.bf16 %v1127, %v1127
        %v1145 = vsel %vm906, %v1140, 0
        %vm1147 = vcmask 1043456
        %v1149 = vsel %vm1147, %v896, 0
        %1151 = vmatprep.subr.bf16.mxu0 0
        %1152 = vmatpush1.bf16.msra.mxu0 0
        %1153 = vmatprep.subr.bf16.mxu0 0
        %1154 = vmatpush1.bf16.msra.mxu0 0
        %1155 = vmatprep.subr.bf16.mxu0 0
        %1156 = vmatpush1.bf16.msra.mxu0 0
        %1157 = vmatprep.subr.bf16.mxu0 0
        %1158 = vmatpush1.bf16.msra.mxu0 0
        %1159 = vmatprep.subr.bf16.mxu0 0
        %1160 = vmatpush1.bf16.msra.mxu0 0
        %1161 = vmatprep.subr.bf16.mxu0 0
        %1162 = vmatpush1.bf16.msra.mxu0 0
        %1163 = vmatprep.subr.bf16.mxu0 0
        %1164 = vmatpush1.bf16.msra.mxu0 0
        %1165 = vmatprep.subr.bf16.mxu0 0
        %1166 = vmatpush1.bf16.msra.mxu0 %v1149
        %1167 = vmatprep.subr.bf16.mxu0 0
        %1168 = vmatpush2.bf16.msra.mxu0 0
        %1169 = vmatprep.subr.bf16.mxu0 0
        %1170 = vmatpush2.bf16.msra.mxu0 0
        %1171 = vmatprep.subr.bf16.mxu0 0
        %1172 = vmatpush2.bf16.msra.mxu0 0
        %1173 = vmatprep.subr.bf16.mxu0 0
        %1174 = vmatpush2.bf16.msra.mxu0 0
        %1175 = vmatprep.subr.bf16.mxu0 0
        %1176 = vmatpush2.bf16.msra.mxu0 0
        %1177 = vmatprep.subr.bf16.mxu0 0
        %1178 = vmatpush2.bf16.msra.mxu0 0
        %1179 = vmatprep.subr.bf16.mxu0 0
        %1180 = vmatpush2.bf16.msra.mxu0 0
        %1181 = vmatprep.subr.bf16.mxu0 0
        %1182 = vmatpush2.bf16.msra.mxu0 0
        %1183 = vmatprep.mubr.bf16.mxu0 0
        %1184 = vmatmul.mubr.bf16.gmra.mxu0 %v1145
        %v1185 = vpop.f32.mrf.mxu0
        %v1186 = vadd.f32 0.0, %v1185
        %v1187 = vpop.f32.mrf.mxu0
        %v1188 = vpop.f32.mrf.mxu0
        %v1189 = vpop.f32.mrf.mxu0
        %1190 = vdwg.mxu0
        %v1192 = vsel %vm906, %v1141, 0
        %v1195 = vsel %vm1147, %v899, 0
        %1197 = vmatprep.subr.bf16.mxu0 0
        %1198 = vmatpush1.bf16.msra.mxu0 0
        %1199 = vmatprep.subr.bf16.mxu0 0
        %1200 = vmatpush1.bf16.msra.mxu0 0
        %1201 = vmatprep.subr.bf16.mxu0 0
        %1202 = vmatpush1.bf16.msra.mxu0 0
        %1203 = vmatprep.subr.bf16.mxu0 0
        %1204 = vmatpush1.bf16.msra.mxu0 0
        %1205 = vmatprep.subr.bf16.mxu0 0
        %1206 = vmatpush1.bf16.msra.mxu0 0
        %1207 = vmatprep.subr.bf16.mxu0 0
        %1208 = vmatpush1.bf16.msra.mxu0 0
        %1209 = vmatprep.subr.bf16.mxu0 0
        %1210 = vmatpush1.bf16.msra.mxu0 0
        %1211 = vmatprep.subr.bf16.mxu0 0
        %1212 = vmatpush1.bf16.msra.mxu0 %v1195
        %1213 = vmatprep.subr.bf16.mxu0 0
        %1214 = vmatpush2.bf16.msra.mxu0 0
        %1215 = vmatprep.subr.bf16.mxu0 0
        %1216 = vmatpush2.bf16.msra.mxu0 0
        %1217 = vmatprep.subr.bf16.mxu0 0
        %1218 = vmatpush2.bf16.msra.mxu0 0
        %1219 = vmatprep.subr.bf16.mxu0 0
        %1220 = vmatpush2.bf16.msra.mxu0 0
        %1221 = vmatprep.subr.bf16.mxu0 0
        %1222 = vmatpush2.bf16.msra.mxu0 0
        %1223 = vmatprep.subr.bf16.mxu0 0
        %1224 = vmatpush2.bf16.msra.mxu0 0
        %1225 = vmatprep.subr.bf16.mxu0 0
        %1226 = vmatpush2.bf16.msra.mxu0 0
        %1227 = vmatprep.subr.bf16.mxu0 0
        %1228 = vmatpush2.bf16.msra.mxu0 0
        %1229 = vmatprep.mubr.bf16.mxu0 0
        %1230 = vmatmul.mubr.bf16.gmra.mxu0 %v1192
        %v1231 = vpop.f32.mrf.mxu0
        %v1232 = vadd.f32 0.0, %v1231
        %v1233 = vpop.f32.mrf.mxu0
        %v1234 = vpop.f32.mrf.mxu0
        %v1235 = vpop.f32.mrf.mxu0
        %1236 = vdwg.mxu0
        %v1238 = vsel %vm906, %v1142, 0
        %v1241 = vsel %vm1147, %v902, 0
        %1243 = vmatprep.subr.bf16.mxu0 0
        %1244 = vmatpush1.bf16.msra.mxu0 0
        %1245 = vmatprep.subr.bf16.mxu0 0
        %1246 = vmatpush1.bf16.msra.mxu0 0
        %1247 = vmatprep.subr.bf16.mxu0 0
        %1248 = vmatpush1.bf16.msra.mxu0 0
        %1249 = vmatprep.subr.bf16.mxu0 0
        %1250 = vmatpush1.bf16.msra.mxu0 0
        %1251 = vmatprep.subr.bf16.mxu0 0
        %1252 = vmatpush1.bf16.msra.mxu0 0
        %1253 = vmatprep.subr.bf16.mxu0 0
        %1254 = vmatpush1.bf16.msra.mxu0 0
        %1255 = vmatprep.subr.bf16.mxu0 0
        %1256 = vmatpush1.bf16.msra.mxu0 0
        %1257 = vmatprep.subr.bf16.mxu0 0
        %1258 = vmatpush1.bf16.msra.mxu0 %v1241
        %1259 = vmatprep.subr.bf16.mxu0 0
        %1260 = vmatpush2.bf16.msra.mxu0 0
        %1261 = vmatprep.subr.bf16.mxu0 0
        %1262 = vmatpush2.bf16.msra.mxu0 0
        %1263 = vmatprep.subr.bf16.mxu0 0
        %1264 = vmatpush2.bf16.msra.mxu0 0
        %1265 = vmatprep.subr.bf16.mxu0 0
        %1266 = vmatpush2.bf16.msra.mxu0 0
        %1267 = vmatprep.subr.bf16.mxu0 0
        %1268 = vmatpush2.bf16.msra.mxu0 0
        %1269 = vmatprep.subr.bf16.mxu0 0
        %1270 = vmatpush2.bf16.msra.mxu0 0
        %1271 = vmatprep.subr.bf16.mxu0 0
        %1272 = vmatpush2.bf16.msra.mxu0 0
        %1273 = vmatprep.subr.bf16.mxu0 0
        %1274 = vmatpush2.bf16.msra.mxu0 0
        %1275 = vmatprep.mubr.bf16.mxu0 0
        %1276 = vmatmul.mubr.bf16.gmra.mxu0 %v1238
        %v1277 = vpop.f32.mrf.mxu0
        %v1278 = vadd.f32 0.0, %v1277
        %v1279 = vpop.f32.mrf.mxu0
        %v1280 = vpop.f32.mrf.mxu0
        %v1281 = vpop.f32.mrf.mxu0
        %1282 = vdwg.mxu0
        %v1284 = vsel %vm906, %v1143, 0
        %v1287 = vsel %vm1147, %v905, 0
        %1289 = vmatprep.subr.bf16.mxu0 0
        %1290 = vmatpush1.bf16.msra.mxu0 0
        %1291 = vmatprep.subr.bf16.mxu0 0
        %1292 = vmatpush1.bf16.msra.mxu0 0
        %1293 = vmatprep.subr.bf16.mxu0 0
        %1294 = vmatpush1.bf16.msra.mxu0 0
        %1295 = vmatprep.subr.bf16.mxu0 0
        %1296 = vmatpush1.bf16.msra.mxu0 0
        %1297 = vmatprep.subr.bf16.mxu0 0
        %1298 = vmatpush1.bf16.msra.mxu0 0
        %1299 = vmatprep.subr.bf16.mxu0 0
        %1300 = vmatpush1.bf16.msra.mxu0 0
        %1301 = vmatprep.subr.bf16.mxu0 0
        %1302 = vmatpush1.bf16.msra.mxu0 0
        %1303 = vmatprep.subr.bf16.mxu0 0
        %1304 = vmatpush1.bf16.msra.mxu0 %v1287
        %1305 = vmatprep.subr.bf16.mxu0 0
        %1306 = vmatpush2.bf16.msra.mxu0 0
        %1307 = vmatprep.subr.bf16.mxu0 0
        %1308 = vmatpush2.bf16.msra.mxu0 0
        %1309 = vmatprep.subr.bf16.mxu0 0
        %1310 = vmatpush2.bf16.msra.mxu0 0
        %1311 = vmatprep.subr.bf16.mxu0 0
        %1312 = vmatpush2.bf16.msra.mxu0 0
        %1313 = vmatprep.subr.bf16.mxu0 0
        %1314 = vmatpush2.bf16.msra.mxu0 0
        %1315 = vmatprep.subr.bf16.mxu0 0
        %1316 = vmatpush2.bf16.msra.mxu0 0
        %1317 = vmatprep.subr.bf16.mxu0 0
        %1318 = vmatpush2.bf16.msra.mxu0 0
        %1319 = vmatprep.subr.bf16.mxu0 0
        %1320 = vmatpush2.bf16.msra.mxu0 0
        %1321 = vmatprep.mubr.bf16.mxu0 0
        %1322 = vmatmul.mubr.bf16.gmra.mxu0 %v1284
        %v1323 = vpop.f32.mrf.mxu0
        %v1324 = vadd.f32 0.0, %v1323
        %v1325 = vpop.f32.mrf.mxu0
        %v1326 = vpop.f32.mrf.mxu0
        %v1327 = vpop.f32.mrf.mxu0
        %1328 = vdwg.mxu0
        %v1329 = vrcp.pop %v1130
        %v1330 = vrcp.pop %v1133
        %v1331 = vrcp.pop %v1136
        %v1332 = vrcp.pop %v1139
        %v1333 = vmul.f32 %v1186, %v1329
        %v1334 = vmul.f32 %v1232, %v1330
        %v1335 = vmul.f32 %v1278, %v1331
        %v1336 = vmul.f32 %v1324, %v1332
        %v1337 = vpack.c.bf16 %v1333, %v1333
        %v1339 = vunpack.c.l.s4 1983009808
        %v1340 = vunpack.c.0.s8 %v1339
        %v1341 = vlaneseq
        %v1342 = vshrl.u32 %v1341, 7
        %v1343 = vsub.s32 %v1340, %v1342
        %v1344 = vrot.slane %v1337, %v1343
        %v1345 = vpack.c.bf16 %v1335, %v1335
        %v1347 = vunpack.c.l.s4 1983009808
        %v1348 = vunpack.c.0.s8 %v1347
        %v1349 = vlaneseq
        %v1350 = vshrl.u32 %v1349, 7
        %v1351 = vsub.s32 %v1348, %v1350
        %v1352 = vrot.slane %v1345, %v1351
        %v1353 = vcombine.low %v1344, %v1352
        %v1354 = vcombine.high %v1344, %v1352
        %v1356 = vunpack.c.l.s4 1934713408
        %v1357 = vunpack.c.0.s8 %v1356
        %v1358 = vlaneseq
        %v1359 = vshrl.u32 %v1358, 7
        %v1360 = vsub.s32 %v1357, %v1359
        %v1361 = vrot.slane %v1353, %v1360
        %v1363 = vunpack.c.l.s4 1934713408
        %v1364 = vunpack.c.0.s8 %v1363
        %v1365 = vlaneseq
        %v1366 = vshrl.u32 %v1365, 7
        %v1367 = vsub.s32 %v1364, %v1366
        %v1368 = vrot.slane %v1354, %v1367
        %v1369 = vcombine.high %v1361, 0
        %v1370 = vcombine.high %v1368, 0
        %v1371 = vpack.c.bf16 %v1334, %v1334
        %v1373 = vunpack.c.l.s4 1983009808
        %v1374 = vunpack.c.0.s8 %v1373
        %v1375 = vlaneseq
        %v1376 = vshrl.u32 %v1375, 7
        %v1377 = vsub.s32 %v1374, %v1376
        %v1378 = vrot.slane %v1371, %v1377
        %v1379 = vpack.c.bf16 %v1336, %v1336
        %v1381 = vunpack.c.l.s4 1983009808
        %v1382 = vunpack.c.0.s8 %v1381
        %v1383 = vlaneseq
        %v1384 = vshrl.u32 %v1383, 7
        %v1385 = vsub.s32 %v1382, %v1384
        %v1386 = vrot.slane %v1379, %v1385
        %v1387 = vcombine.low %v1378, %v1386
        %v1388 = vcombine.high %v1378, %v1386
        %v1390 = vunpack.c.l.s4 1934713408
        %v1391 = vunpack.c.0.s8 %v1390
        %v1392 = vlaneseq
        %v1393 = vshrl.u32 %v1392, 7
        %v1394 = vsub.s32 %v1391, %v1393
        %v1395 = vrot.slane %v1387, %v1394
        %v1397 = vunpack.c.l.s4 1934713408
        %v1398 = vunpack.c.0.s8 %v1397
        %v1399 = vlaneseq
        %v1400 = vshrl.u32 %v1399, 7
        %v1401 = vsub.s32 %v1398, %v1400
        %v1402 = vrot.slane %v1388, %v1401
        %v1403 = vcombine.high %v1395, 0
        %v1404 = vcombine.high %v1402, 0
        %v1407 = vpack.i.b16 %v1395, %v1361
        %v1409 = vshrl.u32 %v1361, 16
        %v1410 = vshrl.u32 %v1395, 16
        %v1411 = vpack.i.b16 %v1410, %v1409
        %v1415 = vpack.i.b16 %v1403, %v1369
        %v1417 = vshrl.u32 %v1369, 16
        %v1418 = vshrl.u32 %v1403, 16
        %v1419 = vpack.i.b16 %v1418, %v1417
        %v1423 = vpack.i.b16 %v1402, %v1368
        %v1425 = vshrl.u32 %v1368, 16
        %v1426 = vshrl.u32 %v1402, 16
        %v1427 = vpack.i.b16 %v1426, %v1425
        %v1431 = vpack.i.b16 %v1404, %v1370
        %v1433 = vshrl.u32 %v1370, 16
        %v1434 = vshrl.u32 %v1404, 16
        %v1435 = vpack.i.b16 %v1434, %v1433
        %v1437 = vcombine.low %v1407, %v1423
        %v1439 = vunpack.c.l.s4 1983009808
        %v1440 = vunpack.c.0.s8 %v1439
        %v1441 = vlaneseq
        %v1442 = vshrl.u32 %v1441, 7
        %v1443 = vsub.s32 %v1440, %v1442
        %v1444 = vrot.slane %v1437, %v1443
        %v1445 = vcombine.low %v1415, %v1431
        %v1447 = vunpack.c.l.s4 1983009808
        %v1448 = vunpack.c.0.s8 %v1447
        %v1449 = vlaneseq
        %v1450 = vshrl.u32 %v1449, 7
        %v1451 = vsub.s32 %v1448, %v1450
        %v1452 = vrot.slane %v1445, %v1451
        %v1453 = vcombine.low %v1444, %v1452
        %v1455 = vunpack.c.l.s4 1934713408
        %v1456 = vunpack.c.0.s8 %v1455
        %v1457 = vlaneseq
        %v1458 = vshrl.u32 %v1457, 7
        %v1459 = vsub.s32 %v1456, %v1458
        %v1460 = vrot.slane %v1453, %v1459
        %v1461 = vcombine.high %v1460, 0
        %v1462 = vcombine.low %v1411, %v1427
        %v1464 = vunpack.c.l.s4 1983009808
        %v1465 = vunpack.c.0.s8 %v1464
        %v1466 = vlaneseq
        %v1467 = vshrl.u32 %v1466, 7
        %v1468 = vsub.s32 %v1465, %v1467
        %v1469 = vrot.slane %v1462, %v1468
        %v1470 = vcombine.low %v1419, %v1435
        %v1472 = vunpack.c.l.s4 1983009808
        %v1473 = vunpack.c.0.s8 %v1472
        %v1474 = vlaneseq
        %v1475 = vshrl.u32 %v1474, 7
        %v1476 = vsub.s32 %v1473, %v1475
        %v1477 = vrot.slane %v1470, %v1476
        %v1478 = vcombine.low %v1469, %v1477
        %v1480 = vunpack.c.l.s4 1934713408
        %v1481 = vunpack.c.0.s8 %v1480
        %v1482 = vlaneseq
        %v1483 = vshrl.u32 %v1482, 7
        %v1484 = vsub.s32 %v1481, %v1483
        %v1485 = vrot.slane %v1478, %v1484
        %v1486 = vcombine.high %v1485, 0
        %v1489 = vpack.i.b16 %v1485, %v1460
        %v1490 = vshrl.u32 %v1460, 16
        %v1491 = vshrl.u32 %v1485, 16
        %v1492 = vpack.i.b16 %v1491, %v1490
        %v1495 = vpack.i.b16 %v1486, %v1461
        %v1496 = vshrl.u32 %v1461, 16
        %v1497 = vshrl.u32 %v1486, 16
        %v1498 = vpack.i.b16 %v1497, %v1496
        %1499 = vrot.lane.b32.xlu0 %v1492, 8
        %v1500 = vpop.permute.xlu0 %1499
        %1501 = vrot.lane.b32.xlu0 %v1495, 16
        %v1502 = vpop.permute.xlu0 %1501
        %1503 = vrot.lane.b32.xlu0 %v1498, 24
        %v1504 = vpop.permute.xlu0 %1503
        %v1507 = vsel %vm906, %v1489, %v1500
        %vm1508 = vcmask 130048
        %v1510 = vsel %vm1508, %v1507, %v1502
        %vm1511 = vcmask 195584
        %v1513 = vsel %vm1511, %v1510, %v1504
        %v1514 = vld [vmem:[#allocation8] sm:$0xf]
        %v1515 = vld [vmem:[#allocation8 + $0x4] sm:$0xf]
        %v1516 = vld [vmem:[#allocation8 + $0x8] sm:$0xf]
        %v1517 = vld [vmem:[#allocation8 + $0xc] sm:$0xf]
        %v1522 = vunpack.c.l.b16 %v1514
        %v1523 = vunpack.c.l.b16 %v1515
        %v1524 = vunpack.c.l.b16 %v1516
        %v1525 = vunpack.c.l.b16 %v1517
        %v1526 = vpack.c.b16 %v1523, %v1522
        %v1527 = vpack.c.b16 %v1525, %v1524
        %v1530 = vsel %vm295, %v1513, 0
        %1532 = vmatprep.subr.bf16.mxu0 0
        %1533 = vmatpush1.bf16.msra.mxu0 0
        %1534 = vmatprep.subr.bf16.mxu0 0
        %1535 = vmatpush1.bf16.msra.mxu0 0
        %1536 = vmatprep.subr.bf16.mxu0 0
        %1537 = vmatpush1.bf16.msra.mxu0 0
        %1538 = vmatprep.subr.bf16.mxu0 0
        %1539 = vmatpush1.bf16.msra.mxu0 0
        %1540 = vmatprep.subr.bf16.mxu0 0
        %1541 = vmatpush1.bf16.msra.mxu0 0
        %1542 = vmatprep.subr.bf16.mxu0 0
        %1543 = vmatpush1.bf16.msra.mxu0 0
        %1544 = vmatprep.subr.bf16.mxu0 0
        %1545 = vmatpush1.bf16.msra.mxu0 %v1527
        %1546 = vmatprep.subr.bf16.mxu0 0
        %1547 = vmatpush1.bf16.msra.mxu0 %v1526
        %1548 = vmatprep.subr.bf16.mxu0 0
        %1549 = vmatpush2.bf16.msra.mxu0 0
        %1550 = vmatprep.subr.bf16.mxu0 0
        %1551 = vmatpush2.bf16.msra.mxu0 0
        %1552 = vmatprep.subr.bf16.mxu0 0
        %1553 = vmatpush2.bf16.msra.mxu0 0
        %1554 = vmatprep.subr.bf16.mxu0 0
        %1555 = vmatpush2.bf16.msra.mxu0 0
        %1556 = vmatprep.subr.bf16.mxu0 0
        %1557 = vmatpush2.bf16.msra.mxu0 0
        %1558 = vmatprep.subr.bf16.mxu0 0
        %1559 = vmatpush2.bf16.msra.mxu0 0
        %1560 = vmatprep.subr.bf16.mxu0 0
        %1561 = vmatpush2.bf16.msra.mxu0 0
        %1562 = vmatprep.subr.bf16.mxu0 0
        %1563 = vmatpush2.bf16.msra.mxu0 0
        %1564 = vmatprep.mubr.bf16.mxu0 0
        %1565 = vmatmul.mubr.bf16.gmra.mxu0 %v1530
        %v1566 = vpop.f32.mrf.mxu0
        %v1567 = vadd.f32 0.0, %v1566
        %v1568 = vpop.f32.mrf.mxu0
        %v1569 = vpop.f32.mrf.mxu0
        %v1570 = vpop.f32.mrf.mxu0
        %1571 = vdwg.mxu0
        %1572 = vst.msk [vmem:[%s270] sm:$0xff] %vm295, %v1567
        %s1573 = sand.u32 %s134, 1
        %s1574 = scalar_lea.sflag [#allocation4], %s1573
        %s1575 = sand.u32 %s134, 1
        %s1576 = smul.addr %s1575, 8
        %s1577 = scalar_lea.vmem [#allocation10], %s1576
        // Predicated region
        $region53: #{tpu_custom_call.1} parent=35 // pred_check
          %p1578 = pneg %p144
        $region54: #{tpu_custom_call.1} parent=35 // pred_check_branch
          %1580 = sbr.rel (%p1578) target = $region56
        $region55: #{tpu_custom_call.1} parent=35 // pred_region
          %s1582 = ssub.s32 128, 128
          %1583 = vsyncadd %s1574, %s1582
          %s1584 = sadd.s32 %s28, %s27
          %s1585 = smul.addr %s1584, 128
          %s1586 = scalar_lea.hbm %s4, %s1585
          %s1588 = sshll.u32 %s1577, 4
          %s1589 = int_to_ptr.vmem [resolvable:$true] %s1588
          %1591 = dma.vmem_to_hbm [thread:$0]  %s1589, 128, %s1586, %s1574
        $region56: #{tpu_custom_call.1} parent=35 // pred_fallthru
          _
      $region36: #{tpu_custom_call.1} parent=5 // pred_fallthru
        _
      %p1592 = scmp.le.s32.totalorder 2, %s18
      // Predicated region
      $region57: #{tpu_custom_call.1} parent=5 // pred_check
        %p1593 = pneg %p1592
      $region58: #{tpu_custom_call.1} parent=5 // pred_check_branch
        %1595 = sbr.rel (%p1593) target = $region60
      $region59: #{tpu_custom_call.1} parent=5 // pred_region
        %s1596 = ssub.s32 %s18, 2
        // Predicated region
        $region61: #{tpu_custom_call.1} parent=59 // pred_check
          %p1597 = pneg %p150
        $region62: #{tpu_custom_call.1} parent=59 // pred_check_branch
          %1599 = sbr.rel (%p1597) target = $region64
        $region63: #{tpu_custom_call.1} parent=59 // pred_region
          %s1600 = sand.u32 %s135, 1
          %s1601 = scalar_lea.sflag [#allocation4], %s1600
          %s1602 = sand.u32 %s135, 1
          %s1603 = smul.addr %s1602, 8
          %s1604 = scalar_lea.vmem [#allocation10], %s1603
          %1605 = dma.done %s1601, 128
        $region64: #{tpu_custom_call.1} parent=59 // pred_fallthru
          _
      $region60: #{tpu_custom_call.1} parent=5 // pred_fallthru
        _
    $region6: #{tpu_custom_call.1} parent=1 // loop_footer
      %s22 = sadd.s32 1, %s18
    $region7: #{tpu_custom_call.1} parent=1 // loop_footer_branch
      %17 = sbr.rel target = $region3
    $region8: #{tpu_custom_call.1} parent=1 // loop_exit
      _
    %1606 = vsyncpa [#allocation3], 1
    %s1607 = scalar_lea.sflag [#allocation3], 1
    %1608 = vsyncpa %s1607, 1
    %1609 = vsyncpa [#allocation6], 1
    %1610 = vsyncpa [#allocation9], 1
    %1611 = vsyncpa [#allocation4], 1
    %s1612 = scalar_lea.sflag [#allocation4], 1
    %1613 = vsyncpa %s1612, 1

</llo_original>
